<compile_context>
chip_gen: v7x
topology: tpu7x:2x2x1
jax: 0.10.0
libtpu: 0.0.40
codegen_flags: <defaults>
</compile_context>

<pallas_src>
import functools

import numpy as np
import jax
import jax.numpy as jnp
from jax import lax
from jax.experimental import pallas as pl
from jax.experimental.pallas import tpu as pltpu


# ----------------------------------------------------------------------------
# Positional encoding (mirrors compute_pe in the PyTorch module; init-time glue)
# ----------------------------------------------------------------------------
def compute_pe(H, W, d, c=10000.0):
    P = np.zeros((H, W, d), dtype=np.float64)
    for i in range(H):
        for j in range(W):
            for k in range(int(d / 4)):
                denom = np.power(c, 4 * k / d)
                P[i, j, 2 * k] = np.sin(i / denom)
                P[i, j, 2 * k + 1] = np.cos(i / denom)
                P[i, j, 2 * k + d // 2] = np.sin(j / denom)
                P[i, j, 2 * k + 1 + d // 2] = np.cos(j / denom)
    return jnp.asarray(np.transpose(P, (2, 0, 1)).astype(np.float32))  # [C, H, W]


# ----------------------------------------------------------------------------
# Pallas kernel: BT batch elements per grid step, lanes ordered (batch, pixel)
# ----------------------------------------------------------------------------
def _fused_kernel(patches_ref, w_ref, bias_ref, w_attn_ref, b_attn_ref, o_ref,
                  *, n_conv, dk, dv, num_heads, bt, l):
    dkh = dk // num_heads
    dvh = dv // num_heads
    scale = dkh ** (-0.5)

    # One fused MXU matmul: [n_conv + 2dk+dv, CKK] (bf16) @ [CKK, BT*L] (bf16)
    # -> f32.  Rows [0, n_conv) = spatial conv branch, rows [n_conv, M) = qkv
    # (x contribution only; W_qkv @ pe + b_qkv is already folded into `bias`).
    fused = jnp.dot(w_ref[...], patches_ref[...],
                    preferred_element_type=jnp.float32) + bias_ref[...]

    # Conv branch: direct lane-dense store, no concat / temporary.
    o_ref[0:n_conv, :] = fused[0:n_conv, :].astype(o_ref.dtype)

    qkv = fused[n_conv:, :]                                  # [2dk+dv, BT*L]
    w_attn = w_attn_ref[...]
    b_attn = b_attn_ref[...]

    # Attention math must be per batch element (softmaxes over each image's
    # own L positions).  BT is small and static -> unroll; heads are batched
    # inside each einsum (no per-head Python loop, no concatenate).
    for b in range(bt):
        lo = b * l
        qkv_b = qkv[:, lo:lo + l]                            # [2dk+dv, L]
        q = qkv_b[0:dk].reshape(num_heads, dkh, l) * scale
        k = qkv_b[dk:2 * dk].reshape(num_heads, dkh, l) * scale
        v = qkv_b[2 * dk:2 * dk + dv].reshape(num_heads, dvh, l)

        # softmax_row over the spatial (lane) axis
        q_max = jnp.max(q, axis=-1, keepdims=True)
        q_exp = jnp.exp(q - q_max)
        wq = q_exp * pl.reciprocal(jnp.sum(q_exp, axis=-1, keepdims=True),
                                   approx=True)              # [H, dkh, L]

        # softmax_col over the dkh axis, per head / position
        k_max = jnp.max(k, axis=1, keepdims=True)
        k_exp = jnp.exp(k - k_max)
        wk = k_exp * pl.reciprocal(jnp.sum(k_exp, axis=1, keepdims=True),
                                   approx=True)              # [H, dkh, L]

        # pre[h,k,m] = sum_l wk[h,k,l] * v[h,m,l]
        pre = jnp.einsum('hkl,hml->hkm', wk, v,
                         preferred_element_type=jnp.float32)  # [H, dkh, dvh]
        # attn[h,m,l] = sum_k pre[h,k,m] * wq[h,k,l]
        attn = jnp.einsum('hkm,hkl->hml', pre, wq,
                          preferred_element_type=jnp.float32)  # [H, dvh, L]
        attn = attn.reshape(dv, l)

        # 1x1 conv_attn
        attn_out = jnp.dot(w_attn, attn,
                           preferred_element_type=jnp.float32) + b_attn
        o_ref[n_conv:n_conv + dv, lo:lo + l] = attn_out.astype(o_ref.dtype)


# ----------------------------------------------------------------------------
# Wrapper (JAX glue: im2col, weight/bias stacking, pallas_call)
# ----------------------------------------------------------------------------
def linear_attention_conv2d(x, pe, w_out, b_out, w_qkv, b_qkv, w_attn, b_attn,
                            *, dk, dv, num_heads, kernel_size, padding,
                            output_dim, batch_tile=None):
    B, Cin, H, W = x.shape
    L = H * W
    K = kernel_size
    p = padding
    n_conv = output_dim - dv
    CKK = Cin * K * K
    M = n_conv + 2 * dk + dv

    # The module concatenates the conv and attention branches -> conv_out must
    # preserve the spatial size, and x must be the zero-shift tap of im2col.
    assert 2 * p == K - 1, "requires 'same' conv padding (2*padding == K-1)"

    # Batch tile per grid step (folds into the lane/N dim of the fused matmul).
    # Shrink for v7x (64 MiB VMEM) at large L; enlarge on v5e/v6e.
    BT = batch_tile if batch_tile is not None else min(B, 8)
    while B % BT:
        BT -= 1
    NL = BT * L
    assert NL % 128 == 0 or BT == B, "BT*H*W must be a multiple of 128"

    # im2col patches (cross-correlation taps), lanes ordered (batch, pixel).
    # Stored in bf16: halves the dominant HBM stream and feeds the MXU bf16
    # path (accumulation stays f32 in-kernel).
    xpad = jnp.pad(x, ((0, 0), (0, 0), (p, p), (p, p)))
    taps = [xpad[:, :, ky:ky + H, kx:kx + W] for ky in range(K) for kx in range(K)]
    patches = jnp.stack(taps, axis=2).reshape(B, CKK, L)        # [B, CKK, L]
    patches = patches.transpose(1, 0, 2).reshape(CKK, B * L)    # [CKK, B*L]
    patches = patches.astype(jnp.bfloat16)

    # Stacked weight: conv rows + qkv rows embedded at the zero-shift tap.
    w_out_f = w_out.reshape(n_conv, CKK)
    w_qkv_f = w_qkv.reshape(2 * dk + dv, Cin)
    t0 = p * K + p                                              # center tap
    w_qkv_embed = jnp.zeros((2 * dk + dv, Cin, K * K), x.dtype)
    w_qkv_embed = w_qkv_embed.at[:, :, t0].set(w_qkv_f).reshape(2 * dk + dv, CKK)
    w_stacked = jnp.concatenate([w_out_f, w_qkv_embed], axis=0).astype(jnp.bfloat16)

    # Stacked per-lane bias (f32): conv channel bias; W_qkv @ pe + b_qkv tiled
    # over the BT batch elements of one grid step.
    pe_flat = pe.reshape(Cin, L).astype(jnp.float32)
    pe_bias = w_qkv_f.astype(jnp.float32) @ pe_flat + b_qkv[:, None]   # [2dk+dv, L]
    bias = jnp.concatenate(
        [jnp.broadcast_to(b_out[:, None].astype(jnp.float32), (n_conv, NL)),
         jnp.tile(pe_bias, (1, BT))], axis=0)                   # [M, BT*L]

    w_attn_f = w_attn.reshape(dv, dv).astype(jnp.float32)
    b_attn_c = b_attn.reshape(dv, 1).astype(jnp.float32)

    kernel = functools.partial(_fused_kernel, n_conv=n_conv, dk=dk, dv=dv,
                               num_heads=num_heads, bt=BT, l=L)

    out_flat = pl.pallas_call(
        kernel,
        out_shape=jax.ShapeDtypeStruct((output_dim, B * L), jnp.float32),
        grid_spec=pltpu.PrefetchScalarGridSpec(
            num_scalar_prefetch=0,
            grid=(B // BT,),
            in_specs=[
                pl.BlockSpec((CKK, NL), lambda b: (0, b)),      # patches (streamed)
                pl.BlockSpec((M, CKK), lambda b: (0, 0)),       # stacked weight
                pl.BlockSpec((M, NL), lambda b: (0, 0)),        # stacked bias
                pl.BlockSpec((dv, dv), lambda b: (0, 0)),       # w_attn
                pl.BlockSpec((dv, 1), lambda b: (0, 0)),        # b_attn
            ],
            out_specs=pl.BlockSpec((output_dim, NL), lambda b: (0, b)),
        ),
        compiler_params=pltpu.CompilerParams(
            dimension_semantics=("parallel",),                  # megacore on v7x
            vmem_limit_bytes=64 * 1024 * 1024,
        ),
    )(patches, w_stacked, bias, w_attn_f, b_attn_c)

    # [output_dim, B*L] -> [B, output_dim, H, W]
    out = out_flat.reshape(output_dim, B, H, W).transpose(1, 0, 2, 3)
    return out.astype(x.dtype)


# ----------------------------------------------------------------------------
# Pure-JAX reference (mirrors the PyTorch forward exactly, all f32)
# ----------------------------------------------------------------------------
def reference(x, pe, w_out, b_out, w_qkv, b_qkv, w_attn, b_attn,
              *, dk, dv, num_heads, padding):
    dn = ('NCHW', 'OIHW', 'NCHW')
    conv_out = lax.conv_general_dilated(
        x, w_out, (1, 1), [(padding, padding)] * 2, dimension_numbers=dn
    ) + b_out[None, :, None, None]

    xp = x + pe[None]
    qkv = lax.conv_general_dilated(
        xp, w_qkv, (1, 1), 'VALID', dimension_numbers=dn
    ) + b_qkv[None, :, None, None]

    B, _, H, W = x.shape
    L = H * W
    dkh = dk // num_heads
    dvh = dv // num_heads

    q = qkv[:, :dk].reshape(B, num_heads, dkh, L) * dkh ** (-0.5)
    k = qkv[:, dk:2 * dk].reshape(B, num_heads, dkh, L) * dkh ** (-0.5)
    v = qkv[:, 2 * dk:2 * dk + dv].reshape(B, num_heads, dvh, L)

    wq = jax.nn.softmax(q, axis=-1)
    wk = jax.nn.softmax(k, axis=-2)
    pre = jnp.einsum('ijkl,ijml->ijkm', wk, v)
    attn = jnp.einsum('ijkl,ijkm->ijml', wq, pre)
    attn = attn.reshape(B, dv, H, W)
    attn = lax.conv_general_dilated(
        attn, w_attn, (1, 1), 'VALID', dimension_numbers=dn
    ) + b_attn[None, :, None, None]

    return jnp.concatenate([conv_out, attn], axis=1)


if __name__ == "__main__":
    # Module hyper-params (small, consistent with the PyTorch __init__)
    B, Cin, H, W = 2, 4, 16, 16
    output_dim, dk, dv, num_heads = 8, 8, 4, 2
    kernel_size, padding = 3, 1
    n_conv = output_dim - dv

    key = jax.random.PRNGKey(0)
    ks = jax.random.split(key, 7)
    x = jax.random.normal(ks[0], (B, Cin, H, W), jnp.float32)
    # Deterministic synthetic parameters (shapes match the nn.Conv2d layers)
    w_qkv = jax.random.normal(ks[1], (2 * dk + dv, Cin, 1, 1), jnp.float32) * 0.1
    b_qkv = jax.random.normal(ks[2], (2 * dk + dv,), jnp.float32) * 0.1
    w_attn = jax.random.normal(ks[3], (dv, dv, 1, 1), jnp.float32) * 0.1
    b_attn = jax.random.normal(ks[4], (dv,), jnp.float32) * 0.1
    w_out = jax.random.normal(ks[5], (n_conv, Cin, kernel_size, kernel_size), jnp.float32) * 0.1
    b_out = jax.random.normal(ks[6], (n_conv,), jnp.float32) * 0.1

    pe = compute_pe(H, W, Cin)

    out = linear_attention_conv2d(
        x, pe, w_out, b_out, w_qkv, b_qkv, w_attn, b_attn,
        dk=dk, dv=dv, num_heads=num_heads,
        kernel_size=kernel_size, padding=padding, output_dim=output_dim)
    out = jax.block_until_ready(out)

    ref = reference(x, pe, w_out, b_out, w_qkv, b_qkv, w_attn, b_attn,
                    dk=dk, dv=dv, num_heads=num_heads, padding=padding)

    assert out.shape == (B, output_dim, H, W)
    # Tolerance accounts for bf16 MXU operands (patches/weights) and the
    # approx EUP reciprocal in the softmaxes (per the perf review); observed
    # error is ~1e-3 absolute at these sizes.
    np.testing.assert_allclose(np.asarray(out), np.asarray(ref), atol=2e-2, rtol=2e-2)
    print("KERNEL_OK")
</pallas_src>

<mosaic_0001>
module attributes {stable_mosaic.version = 11 : i64} {
  func.func @_fused_kernel(%arg0: i32, %arg1: memref<36x512xbf16, #tpu.memory_space<vmem>>, %arg2: memref<24x36xbf16, #tpu.memory_space<vmem>>, %arg3: memref<24x512xf32, #tpu.memory_space<vmem>>, %arg4: memref<4x4xf32, #tpu.memory_space<vmem>>, %arg5: memref<4x1xf32, #tpu.memory_space<vmem>>, %arg6: memref<8x512xf32, #tpu.memory_space<vmem>>) attributes {dimension_semantics = [#tpu.dimension_semantics<parallel>], iteration_bounds = array<i64: 1>, scalar_prefetch = 0 : i64, scratch_operands = 0 : i64, tpu.core_type = #tpu.core_type<tc>, window_params = [{transform_indices = @transform_0, window_bounds = array<i64: 36, 512>}, {pipeline_mode = #tpu.pipeline_mode<synchronous>, transform_indices = @transform_1, window_bounds = array<i64: 24, 36>}, {pipeline_mode = #tpu.pipeline_mode<synchronous>, transform_indices = @transform_2, window_bounds = array<i64: 24, 512>}, {pipeline_mode = #tpu.pipeline_mode<synchronous>, transform_indices = @transform_3, window_bounds = array<i64: 4, 4>}, {pipeline_mode = #tpu.pipeline_mode<synchronous>, transform_indices = @transform_4, window_bounds = array<i64: 4, 1>}, {transform_indices = @transform_5, window_bounds = array<i64: 8, 512>}]} {
    %c0 = arith.constant 0 : index
    %c0_0 = arith.constant 0 : index
    %0 = vector.load %arg2[%c0, %c0_0] : memref<24x36xbf16, #tpu.memory_space<vmem>>, vector<24x36xbf16>
    %c0_1 = arith.constant 0 : index
    %c0_2 = arith.constant 0 : index
    %1 = vector.load %arg1[%c0_1, %c0_2] : memref<36x512xbf16, #tpu.memory_space<vmem>>, vector<36x512xbf16>
    %cst = arith.constant dense<0.000000e+00> : vector<24x512xf32>
    %2 = tpu.matmul %0, %1, %cst {dimension_numbers = #tpu.dot_dimension_numbers<[1], [0], [0], [1], [0, 0, 1, 1], [], []>} : vector<24x36xbf16>, vector<36x512xbf16>, vector<24x512xf32> -> vector<24x512xf32>
    %c0_3 = arith.constant 0 : index
    %c0_4 = arith.constant 0 : index
    %3 = vector.load %arg3[%c0_3, %c0_4] : memref<24x512xf32, #tpu.memory_space<vmem>>, vector<24x512xf32>
    %4 = arith.addf %2, %3 : vector<24x512xf32>
    %5 = vector.extract_strided_slice %4 {offsets = [0, 0], sizes = [4, 512], strides = [1, 1]} : vector<24x512xf32> to vector<4x512xf32>
    %c0_5 = arith.constant 0 : index
    %c0_6 = arith.constant 0 : index
    %6 = vector.load %arg6[%c0_5, %c0_6] : memref<8x512xf32, #tpu.memory_space<vmem>>, vector<4x512xf32>
    tpu.vector_store %arg6[%c0_5, %c0_6], %5 {strides = array<i32>} : memref<8x512xf32, #tpu.memory_space<vmem>>, vector<4x512xf32>,
    %7 = vector.extract_strided_slice %4 {offsets = [4, 0], sizes = [20, 512], strides = [1, 1]} : vector<24x512xf32> to vector<20x512xf32>
    %c0_7 = arith.constant 0 : index
    %c0_8 = arith.constant 0 : index
    %8 = vector.load %arg4[%c0_7, %c0_8] : memref<4x4xf32, #tpu.memory_space<vmem>>, vector<4x4xf32>
    %c0_9 = arith.constant 0 : index
    %c0_10 = arith.constant 0 : index
    %9 = vector.load %arg5[%c0_9, %c0_10] : memref<4x1xf32, #tpu.memory_space<vmem>>, vector<4x1xf32>
    %10 = vector.extract_strided_slice %7 {offsets = [0, 0], sizes = [20, 256], strides = [1, 1]} : vector<20x512xf32> to vector<20x256xf32>
    %11 = vector.extract_strided_slice %10 {offsets = [0, 0], sizes = [8, 256], strides = [1, 1]} : vector<20x256xf32> to vector<8x256xf32>
    %12 = vector.shape_cast %11 : vector<8x256xf32> to vector<2x4x256xf32>
    %cst_11 = arith.constant 5.000000e-01 : f32
    %13 = vector.broadcast %cst_11 : f32 to vector<2x4x256xf32>
    %14 = arith.mulf %12, %13 : vector<2x4x256xf32>
    %15 = vector.extract_strided_slice %10 {offsets = [8, 0], sizes = [8, 256], strides = [1, 1]} : vector<20x256xf32> to vector<8x256xf32>
    %16 = vector.shape_cast %15 : vector<8x256xf32> to vector<2x4x256xf32>
    %cst_12 = arith.constant 5.000000e-01 : f32
    %17 = vector.broadcast %cst_12 : f32 to vector<2x4x256xf32>
    %18 = arith.mulf %16, %17 : vector<2x4x256xf32>
    %19 = vector.extract_strided_slice %10 {offsets = [16, 0], sizes = [4, 256], strides = [1, 1]} : vector<20x256xf32> to vector<4x256xf32>
    %20 = vector.shape_cast %19 : vector<4x256xf32> to vector<2x2x256xf32>
    %cst_13 = arith.constant dense<0xFF800000> : vector<2x4xf32>
    %21 = vector.multi_reduction <maximumf>, %14, %cst_13 [2] : vector<2x4x256xf32> to vector<2x4xf32>
    %22 = vector.shape_cast %21 : vector<2x4xf32> to vector<2x4x1xf32>
    %23 = vector.broadcast %22 : vector<2x4x1xf32> to vector<2x4x256xf32>
    %24 = arith.subf %14, %23 : vector<2x4x256xf32>
    %25 = math.exp %24 : vector<2x4x256xf32>
    %cst_14 = arith.constant dense<0.000000e+00> : vector<2x4xf32>
    %26 = vector.multi_reduction <add>, %25, %cst_14 [2] : vector<2x4x256xf32> to vector<2x4xf32>
    %27 = vector.shape_cast %26 : vector<2x4xf32> to vector<2x4x1xf32>
    %28 = tpu.reciprocal %27 {approx = true} : vector<2x4x1xf32> -> vector<2x4x1xf32>
    %29 = vector.broadcast %28 : vector<2x4x1xf32> to vector<2x4x256xf32>
    %30 = arith.mulf %25, %29 : vector<2x4x256xf32>
    %cst_15 = arith.constant dense<0xFF800000> : vector<2x256xf32>
    %31 = vector.multi_reduction <maximumf>, %18, %cst_15 [1] : vector<2x4x256xf32> to vector<2x256xf32>
    %32 = vector.shape_cast %31 : vector<2x256xf32> to vector<2x1x256xf32>
    %33 = vector.broadcast %32 : vector<2x1x256xf32> to vector<2x4x256xf32>
    %34 = arith.subf %18, %33 : vector<2x4x256xf32>
    %35 = math.exp %34 : vector<2x4x256xf32>
    %cst_16 = arith.constant dense<0.000000e+00> : vector<2x256xf32>
    %36 = vector.multi_reduction <add>, %35, %cst_16 [1] : vector<2x4x256xf32> to vector<2x256xf32>
    %37 = vector.shape_cast %36 : vector<2x256xf32> to vector<2x1x256xf32>
    %38 = tpu.reciprocal %37 {approx = true} : vector<2x1x256xf32> -> vector<2x1x256xf32>
    %39 = vector.broadcast %38 : vector<2x1x256xf32> to vector<2x4x256xf32>
    %40 = arith.mulf %35, %39 : vector<2x4x256xf32>
    "tpu.trace_start"() <{level = 10 : i32, message = "hkl,hml->hkm"}> : () -> ()
    %cst_17 = arith.constant dense<0.000000e+00> : vector<2x4x2xf32>
    %41 = tpu.matmul %40, %20, %cst_17 {dimension_numbers = #tpu.dot_dimension_numbers<[2], [2], [1], [1], [0, 0, 0, 1, 1, 1], [0], [0]>} : vector<2x4x256xf32>, vector<2x2x256xf32>, vector<2x4x2xf32> -> vector<2x4x2xf32>
    "tpu.trace_stop"() : () -> ()
    "tpu.trace_start"() <{level = 10 : i32, message = "hkm,hkl->hml"}> : () -> ()
    %cst_18 = arith.constant dense<0.000000e+00> : vector<2x2x256xf32>
    %42 = tpu.matmul %41, %30, %cst_18 {dimension_numbers = #tpu.dot_dimension_numbers<[1], [1], [2], [2], [0, 0, 0, 2, 1, 2], [0], [0]>} : vector<2x4x2xf32>, vector<2x4x256xf32>, vector<2x2x256xf32> -> vector<2x2x256xf32>
    "tpu.trace_stop"() : () -> ()
    %43 = vector.shape_cast %42 : vector<2x2x256xf32> to vector<4x256xf32>
    %cst_19 = arith.constant dense<0.000000e+00> : vector<4x256xf32>
    %44 = tpu.matmul %8, %43, %cst_19 {dimension_numbers = #tpu.dot_dimension_numbers<[1], [0], [0], [1], [0, 0, 1, 1], [], []>} : vector<4x4xf32>, vector<4x256xf32>, vector<4x256xf32> -> vector<4x256xf32>
    %45 = vector.broadcast %9 : vector<4x1xf32> to vector<4x256xf32>
    %46 = arith.addf %44, %45 : vector<4x256xf32>
    %c4 = arith.constant 4 : index
    %c0_20 = arith.constant 0 : index
    %47 = vector.load %arg6[%c4, %c0_20] : memref<8x512xf32, #tpu.memory_space<vmem>>, vector<4x256xf32>
    tpu.vector_store %arg6[%c4, %c0_20], %46 {strides = array<i32>} : memref<8x512xf32, #tpu.memory_space<vmem>>, vector<4x256xf32>,
    %48 = vector.extract_strided_slice %7 {offsets = [0, 256], sizes = [20, 256], strides = [1, 1]} : vector<20x512xf32> to vector<20x256xf32>
    %49 = vector.extract_strided_slice %48 {offsets = [0, 0], sizes = [8, 256], strides = [1, 1]} : vector<20x256xf32> to vector<8x256xf32>
    %50 = vector.shape_cast %49 : vector<8x256xf32> to vector<2x4x256xf32>
    %cst_21 = arith.constant 5.000000e-01 : f32
    %51 = vector.broadcast %cst_21 : f32 to vector<2x4x256xf32>
    %52 = arith.mulf %50, %51 : vector<2x4x256xf32>
    %53 = vector.extract_strided_slice %48 {offsets = [8, 0], sizes = [8, 256], strides = [1, 1]} : vector<20x256xf32> to vector<8x256xf32>
    %54 = vector.shape_cast %53 : vector<8x256xf32> to vector<2x4x256xf32>
    %cst_22 = arith.constant 5.000000e-01 : f32
    %55 = vector.broadcast %cst_22 : f32 to vector<2x4x256xf32>
    %56 = arith.mulf %54, %55 : vector<2x4x256xf32>
    %57 = vector.extract_strided_slice %48 {offsets = [16, 0], sizes = [4, 256], strides = [1, 1]} : vector<20x256xf32> to vector<4x256xf32>
    %58 = vector.shape_cast %57 : vector<4x256xf32> to vector<2x2x256xf32>
    %cst_23 = arith.constant dense<0xFF800000> : vector<2x4xf32>
    %59 = vector.multi_reduction <maximumf>, %52, %cst_23 [2] : vector<2x4x256xf32> to vector<2x4xf32>
    %60 = vector.shape_cast %59 : vector<2x4xf32> to vector<2x4x1xf32>
    %61 = vector.broadcast %60 : vector<2x4x1xf32> to vector<2x4x256xf32>
    %62 = arith.subf %52, %61 : vector<2x4x256xf32>
    %63 = math.exp %62 : vector<2x4x256xf32>
    %cst_24 = arith.constant dense<0.000000e+00> : vector<2x4xf32>
    %64 = vector.multi_reduction <add>, %63, %cst_24 [2] : vector<2x4x256xf32> to vector<2x4xf32>
    %65 = vector.shape_cast %64 : vector<2x4xf32> to vector<2x4x1xf32>
    %66 = tpu.reciprocal %65 {approx = true} : vector<2x4x1xf32> -> vector<2x4x1xf32>
    %67 = vector.broadcast %66 : vector<2x4x1xf32> to vector<2x4x256xf32>
    %68 = arith.mulf %63, %67 : vector<2x4x256xf32>
    %cst_25 = arith.constant dense<0xFF800000> : vector<2x256xf32>
    %69 = vector.multi_reduction <maximumf>, %56, %cst_25 [1] : vector<2x4x256xf32> to vector<2x256xf32>
    %70 = vector.shape_cast %69 : vector<2x256xf32> to vector<2x1x256xf32>
    %71 = vector.broadcast %70 : vector<2x1x256xf32> to vector<2x4x256xf32>
    %72 = arith.subf %56, %71 : vector<2x4x256xf32>
    %73 = math.exp %72 : vector<2x4x256xf32>
    %cst_26 = arith.constant dense<0.000000e+00> : vector<2x256xf32>
    %74 = vector.multi_reduction <add>, %73, %cst_26 [1] : vector<2x4x256xf32> to vector<2x256xf32>
    %75 = vector.shape_cast %74 : vector<2x256xf32> to vector<2x1x256xf32>
    %76 = tpu.reciprocal %75 {approx = true} : vector<2x1x256xf32> -> vector<2x1x256xf32>
    %77 = vector.broadcast %76 : vector<2x1x256xf32> to vector<2x4x256xf32>
    %78 = arith.mulf %73, %77 : vector<2x4x256xf32>
    "tpu.trace_start"() <{level = 10 : i32, message = "hkl,hml->hkm"}> : () -> ()
    %cst_27 = arith.constant dense<0.000000e+00> : vector<2x4x2xf32>
    %79 = tpu.matmul %78, %58, %cst_27 {dimension_numbers = #tpu.dot_dimension_numbers<[2], [2], [1], [1], [0, 0, 0, 1, 1, 1], [0], [0]>} : vector<2x4x256xf32>, vector<2x2x256xf32>, vector<2x4x2xf32> -> vector<2x4x2xf32>
    "tpu.trace_stop"() : () -> ()
    "tpu.trace_start"() <{level = 10 : i32, message = "hkm,hkl->hml"}> : () -> ()
    %cst_28 = arith.constant dense<0.000000e+00> : vector<2x2x256xf32>
    %80 = tpu.matmul %79, %68, %cst_28 {dimension_numbers = #tpu.dot_dimension_numbers<[1], [1], [2], [2], [0, 0, 0, 2, 1, 2], [0], [0]>} : vector<2x4x2xf32>, vector<2x4x256xf32>, vector<2x2x256xf32> -> vector<2x2x256xf32>
    "tpu.trace_stop"() : () -> ()
    %81 = vector.shape_cast %80 : vector<2x2x256xf32> to vector<4x256xf32>
    %cst_29 = arith.constant dense<0.000000e+00> : vector<4x256xf32>
    %82 = tpu.matmul %8, %81, %cst_29 {dimension_numbers = #tpu.dot_dimension_numbers<[1], [0], [0], [1], [0, 0, 1, 1], [], []>} : vector<4x4xf32>, vector<4x256xf32>, vector<4x256xf32> -> vector<4x256xf32>
    %83 = vector.broadcast %9 : vector<4x1xf32> to vector<4x256xf32>
    %84 = arith.addf %82, %83 : vector<4x256xf32>
    %c4_30 = arith.constant 4 : index
    %c256 = arith.constant 256 : index
    %85 = vector.load %arg6[%c4_30, %c256] : memref<8x512xf32, #tpu.memory_space<vmem>>, vector<4x256xf32>
    tpu.vector_store %arg6[%c4_30, %c256], %84 {strides = array<i32>} : memref<8x512xf32, #tpu.memory_space<vmem>>, vector<4x256xf32>,
    return
  }
  func.func @transform_0(%arg0: i32) -> (i32, i32) {
    %c0_i32 = arith.constant 0 : i32
    %c0_i32_0 = arith.constant 0 : i32
    return %c0_i32, %arg0 : i32, i32
  }
  func.func @transform_1(%arg0: i32) -> (i32, i32) {
    %c0_i32 = arith.constant 0 : i32
    %c0_i32_0 = arith.constant 0 : i32
    %c0_i32_1 = arith.constant 0 : i32
    return %c0_i32, %c0_i32_0 : i32, i32
  }
  func.func @transform_2(%arg0: i32) -> (i32, i32) {
    %c0_i32 = arith.constant 0 : i32
    %c0_i32_0 = arith.constant 0 : i32
    %c0_i32_1 = arith.constant 0 : i32
    return %c0_i32, %c0_i32_0 : i32, i32
  }
  func.func @transform_3(%arg0: i32) -> (i32, i32) {
    %c0_i32 = arith.constant 0 : i32
    %c0_i32_0 = arith.constant 0 : i32
    %c0_i32_1 = arith.constant 0 : i32
    return %c0_i32, %c0_i32_0 : i32, i32
  }
  func.func @transform_4(%arg0: i32) -> (i32, i32) {
    %c0_i32 = arith.constant 0 : i32
    %c0_i32_0 = arith.constant 0 : i32
    %c0_i32_1 = arith.constant 0 : i32
    return %c0_i32, %c0_i32_0 : i32, i32
  }
  func.func @transform_5(%arg0: i32) -> (i32, i32) {
    %c0_i32 = arith.constant 0 : i32
    %c0_i32_0 = arith.constant 0 : i32
    return %c0_i32, %arg0 : i32, i32
  }
}

</mosaic_0001>

<llo_original>
// kernel: tpu_custom_call.1
$region0: #{tpu_custom_call.1}
  #allocation0 [shape = 'u32[]', space=smem, size = 0x4, offset = 0x4, fixed_abs, tag = 'smem constant byte address 0x4 - core index']
  #allocation1 [shape = 'u32[144,128]{1,0:T(1,128)}', space=vmem, size = 0x12000, scoped, tag = 'internal scratch']
  %s0 = inlined_call_operand.hbm [shape: bf16[36,512], index: 0, kind: input, shape index: {}]
  %s1 = inlined_call_operand.hbm [shape: bf16[24,36], index: 1, kind: input, shape index: {}]
  %s2 = inlined_call_operand.hbm [shape: f32[24,512], index: 2, kind: input, shape index: {}]
  %s3 = inlined_call_operand.hbm [shape: f32[4,4], index: 3, kind: input, shape index: {}]
  %s4 = inlined_call_operand.hbm [shape: f32[4,1], index: 4, kind: input, shape index: {}]
  %s5 = inlined_call_operand.hbm [shape: f32[8,512], index: 5, kind: output, shape index: {}]
  %s6 = sld [smem:[#allocation0]]
  $region50: #{tpu_custom_call.1} parent=0
    _
  %s8 = ssub.s32 1, %s6
  %s9 = scalar_select 0, %s8, %s6
  $region1: #{tpu_custom_call.1} parent=0
    #allocation2 [shape = 'u8[40960]{0}', space=vmem, size = 0xa000, scoped, tag = 'input window, operand 0, single buffered']
    #allocation3 [shape = 's32[1]{0}', space=sflag, size = 0x4, scoped, tag = 'scoped memory for tpu_custom_call.1']
    #allocation4 [shape = 's32[1]{0}', space=sflag, size = 0x4, scoped, tag = 'scoped memory for tpu_custom_call.1']
    #allocation5 [shape = 'u8[6144]{0}', space=vmem, size = 0x1800, scoped, tag = 'input window, operand 1, single buffered']
    #allocation6 [shape = 's32[1]{0}', space=sflag, size = 0x4, scoped, tag = 'scoped memory for tpu_custom_call.1']
    #allocation7 [shape = 'u8[49152]{0}', space=vmem, size = 0xc000, scoped, tag = 'input window, operand 2, single buffered']
    #allocation8 [shape = 'u8[2048]{0}', space=vmem, size = 0x800, scoped, tag = 'input window, operand 3, single buffered']
    #allocation9 [shape = 's32[1]{0}', space=sflag, size = 0x4, scoped, tag = 'scoped memory for tpu_custom_call.1']
    #allocation10 [shape = 'u8[2048]{0}', space=vmem, size = 0x800, scoped, tag = 'input window, operand 4, single buffered']
    #allocation11 [shape = 'u8[16384]{0}', space=vmem, size = 0x4000, scoped, tag = 'output window, operand 0, single buffered']
    %10 = vsyncpa [#allocation3], 0
    %11 = vsyncpa [#allocation6], 0
    %12 = vsyncpa [#allocation9], 0
    %13 = vsyncpa [#allocation4], 0
    // Predicated region
    $region2: #{tpu_custom_call.1} parent=1 // pred_check
      _
    $region3: #{tpu_custom_call.1} parent=1 // pred_check_branch
      %15 = sbr.rel (0) target = $region5
    $region4: #{tpu_custom_call.1} parent=1 // pred_region
      %s17 = ssub.s32 1280, 1280
      %18 = vsyncadd [#allocation3], %s17
      %s19 = sshll.u32 [#allocation2], 4
      %s20 = int_to_ptr.vmem [resolvable:$true] %s19
      %25 = dma.hbm_to_vmem [thread:$0]  %s0, 1280, %s20, [#allocation3], 256, 256, 16
    $region5: #{tpu_custom_call.1} parent=1 // pred_fallthru
      _
    // Predicated region
    $region6: #{tpu_custom_call.1} parent=1 // pred_check
      _
    $region7: #{tpu_custom_call.1} parent=1 // pred_check_branch
      %27 = sbr.rel (0) target = $region9
    $region8: #{tpu_custom_call.1} parent=1 // pred_region
      %s29 = ssub.s32 192, 192
      %30 = vsyncadd [#allocation6], %s29
      %s31 = sshll.u32 [#allocation5], 4
      %s32 = int_to_ptr.vmem [resolvable:$true] %s31
      %37 = dma.hbm_to_vmem [thread:$0]  %s1, 192, %s32, [#allocation6], 64, 64, 4
    $region9: #{tpu_custom_call.1} parent=1 // pred_fallthru
      _
    // Predicated region
    $region10: #{tpu_custom_call.1} parent=1 // pred_check
      _
    $region11: #{tpu_custom_call.1} parent=1 // pred_check_branch
      %39 = sbr.rel (0) target = $region13
    $region12: #{tpu_custom_call.1} parent=1 // pred_region
      %s41 = ssub.s32 1536, 1536
      %42 = vsyncadd [#allocation6], %s41
      %s43 = sshll.u32 [#allocation7], 4
      %s44 = int_to_ptr.vmem [resolvable:$true] %s43
      %49 = dma.hbm_to_vmem [thread:$0]  %s2, 1536, %s44, [#allocation6], 512, 512, 32
    $region13: #{tpu_custom_call.1} parent=1 // pred_fallthru
      _
    // Predicated region
    $region14: #{tpu_custom_call.1} parent=1 // pred_check
      _
    $region15: #{tpu_custom_call.1} parent=1 // pred_check_branch
      %51 = sbr.rel (0) target = $region17
    $region16: #{tpu_custom_call.1} parent=1 // pred_region
      %s53 = ssub.s32 64, 64
      %54 = vsyncadd [#allocation9], %s53
      %s56 = sshll.u32 [#allocation8], 4
      %s57 = int_to_ptr.vmem [resolvable:$true] %s56
      %59 = dma.hbm_to_vmem [thread:$0]  %s3, 64, %s57, [#allocation9]
    $region17: #{tpu_custom_call.1} parent=1 // pred_fallthru
      _
    // Predicated region
    $region18: #{tpu_custom_call.1} parent=1 // pred_check
      _
    $region19: #{tpu_custom_call.1} parent=1 // pred_check_branch
      %61 = sbr.rel (0) target = $region21
    $region20: #{tpu_custom_call.1} parent=1 // pred_region
      %s63 = ssub.s32 64, 64
      %64 = vsyncadd [#allocation9], %s63
      %s66 = sshll.u32 [#allocation10], 4
      %s67 = int_to_ptr.vmem [resolvable:$true] %s66
      %69 = dma.hbm_to_vmem [thread:$0]  %s4, 64, %s67, [#allocation9]
    $region21: #{tpu_custom_call.1} parent=1 // pred_fallthru
      _
    // Predicated region
    $region22: #{tpu_custom_call.1} parent=1 // pred_check
      _
    $region23: #{tpu_custom_call.1} parent=1 // pred_check_branch
      %71 = sbr.rel (0) target = $region25
    $region24: #{tpu_custom_call.1} parent=1 // pred_region
      %72 = dma.done [#allocation3], 1280
    $region25: #{tpu_custom_call.1} parent=1 // pred_fallthru
      _
    // Predicated region
    $region26: #{tpu_custom_call.1} parent=1 // pred_check
      _
    $region27: #{tpu_custom_call.1} parent=1 // pred_check_branch
      %74 = sbr.rel (0) target = $region29
    $region28: #{tpu_custom_call.1} parent=1 // pred_region
      %75 = dma.done [#allocation6], 192
    $region29: #{tpu_custom_call.1} parent=1 // pred_fallthru
      _
    // Predicated region
    $region30: #{tpu_custom_call.1} parent=1 // pred_check
      _
    $region31: #{tpu_custom_call.1} parent=1 // pred_check_branch
      %77 = sbr.rel (0) target = $region33
    $region32: #{tpu_custom_call.1} parent=1 // pred_region
      %78 = dma.done [#allocation6], 1536
    $region33: #{tpu_custom_call.1} parent=1 // pred_fallthru
      _
    // Predicated region
    $region34: #{tpu_custom_call.1} parent=1 // pred_check
      _
    $region35: #{tpu_custom_call.1} parent=1 // pred_check_branch
      %80 = sbr.rel (0) target = $region37
    $region36: #{tpu_custom_call.1} parent=1 // pred_region
      %81 = dma.done [#allocation9], 64
    $region37: #{tpu_custom_call.1} parent=1 // pred_fallthru
      _
    // Predicated region
    $region38: #{tpu_custom_call.1} parent=1 // pred_check
      _
    $region39: #{tpu_custom_call.1} parent=1 // pred_check_branch
      %83 = sbr.rel (0) target = $region41
    $region40: #{tpu_custom_call.1} parent=1 // pred_region
      %84 = dma.done [#allocation9], 64
    $region41: #{tpu_custom_call.1} parent=1 // pred_fallthru
      _
    %v86 = vld [vmem:[#allocation5] sm:$0xf]
    %v87 = vld [vmem:[#allocation5 + $0x4] sm:$0xf]
    %v88 = vld [vmem:[#allocation5 + $0x8] sm:$0xf]
    %v89 = vld [vmem:[#allocation2] sm:$0xff]
    %v90 = vld [vmem:[#allocation2 + $0x8] sm:$0xff]
    %v91 = vld [vmem:[#allocation2 + $0x10] sm:$0xff]
    %v92 = vld [vmem:[#allocation2 + $0x18] sm:$0xff]
    %v93 = vld [vmem:[#allocation2 + $0x20] sm:$0xff]
    %v94 = vld [vmem:[#allocation2 + $0x28] sm:$0xff]
    %v95 = vld [vmem:[#allocation2 + $0x30] sm:$0xff]
    %v96 = vld [vmem:[#allocation2 + $0x38] sm:$0xff]
    %v97 = vld [vmem:[#allocation2 + $0x40] sm:$0x33]
    %v98 = vld [vmem:[#allocation2 + $0x48] sm:$0x33]
    %v99 = vld [vmem:[#allocation7] sm:$0xff]
    %v100 = vld [vmem:[#allocation7 + $0x8] sm:$0xff]
    %v101 = vld [vmem:[#allocation7 + $0x10] sm:$0xff]
    %v102 = vld [vmem:[#allocation7 + $0x18] sm:$0xff]
    %v103 = vld [vmem:[#allocation7 + $0x20] sm:$0xff]
    %v104 = vld [vmem:[#allocation7 + $0x28] sm:$0xff]
    %v105 = vld [vmem:[#allocation7 + $0x30] sm:$0xff]
    %v106 = vld [vmem:[#allocation7 + $0x38] sm:$0xff]
    %v107 = vld [vmem:[#allocation7 + $0x40] sm:$0xff]
    %v108 = vld [vmem:[#allocation7 + $0x48] sm:$0xff]
    %v109 = vld [vmem:[#allocation7 + $0x50] sm:$0xff]
    %v110 = vld [vmem:[#allocation7 + $0x58] sm:$0xff]
    %v114 = vunpack.c.l.b16 %v86
    %v115 = vunpack.c.l.b16 %v87
    %v116 = vunpack.c.l.b16 %v88
    %v117 = vpack.c.b16 %v115, %v114
    %v118 = vpack.c.b16 %v116, %v116
    %v129 = vunpack.c.l.b16 %v89
    %v130 = vunpack.c.h.b16 %v89
    %v131 = vunpack.c.l.b16 %v90
    %v132 = vunpack.c.h.b16 %v90
    %v133 = vunpack.c.l.b16 %v91
    %v134 = vunpack.c.h.b16 %v91
    %v135 = vunpack.c.l.b16 %v92
    %v136 = vunpack.c.h.b16 %v92
    %v137 = vunpack.c.l.b16 %v93
    %v138 = vunpack.c.h.b16 %v93
    %v139 = vunpack.c.l.b16 %v94
    %v140 = vunpack.c.h.b16 %v94
    %v141 = vunpack.c.l.b16 %v95
    %v142 = vunpack.c.h.b16 %v95
    %v143 = vunpack.c.l.b16 %v96
    %v144 = vunpack.c.h.b16 %v96
    %v145 = vunpack.c.l.b16 %v97
    %v146 = vunpack.c.h.b16 %v97
    %v147 = vunpack.c.l.b16 %v98
    %v148 = vunpack.c.h.b16 %v98
    %v149 = vpack.c.b16 %v133, %v129
    %v150 = vpack.c.b16 %v134, %v130
    %v151 = vpack.c.b16 %v135, %v131
    %v152 = vpack.c.b16 %v136, %v132
    %v153 = vpack.c.b16 %v141, %v137
    %v154 = vpack.c.b16 %v142, %v138
    %v155 = vpack.c.b16 %v143, %v139
    %v156 = vpack.c.b16 %v144, %v140
    %v157 = vpack.c.b16 %v145, %v145
    %v158 = vpack.c.b16 %v146, %v146
    %v159 = vpack.c.b16 %v147, %v147
    %v160 = vpack.c.b16 %v148, %v148
    %vm169 = vcmask 293888
    %v171 = vsel %vm169, %v117, 0
    %v174 = vsel %vm169, %v118, 0
    %vm176 = vcmask 1041408
    %v178 = vsel %vm176, %v157, 0
    %v181 = vsel %vm176, %v158, 0
    %v184 = vsel %vm176, %v159, 0
    %v187 = vsel %vm176, %v160, 0
    %189 = vmatprep.subr.bf16.mxu0 %v150
    %190 = vmatpush1.bf16.msra.mxu0 %v149
    %191 = vmatprep.subr.bf16.mxu0 %v154
    %192 = vmatpush1.bf16.msra.mxu0 %v153
    %193 = vmatprep.subr.bf16.mxu0 %v181
    %194 = vmatpush1.bf16.msra.mxu0 %v178
    %195 = vmatprep.subr.bf16.mxu0 0
    %196 = vmatpush1.bf16.msra.mxu0 0
    %197 = vmatprep.subr.bf16.mxu0 0
    %198 = vmatpush1.bf16.msra.mxu0 0
    %199 = vmatprep.subr.bf16.mxu0 0
    %200 = vmatpush1.bf16.msra.mxu0 0
    %201 = vmatprep.subr.bf16.mxu0 0
    %202 = vmatpush1.bf16.msra.mxu0 0
    %203 = vmatprep.subr.bf16.mxu0 0
    %204 = vmatpush1.bf16.msra.mxu0 0
    %205 = vmatprep.subr.bf16.mxu0 0
    %206 = vmatpush1.bf16.msra.mxu0 0
    %207 = vmatprep.subr.bf16.mxu0 0
    %208 = vmatpush1.bf16.msra.mxu0 0
    %209 = vmatprep.subr.bf16.mxu0 0
    %210 = vmatpush1.bf16.msra.mxu0 0
    %211 = vmatprep.subr.bf16.mxu0 0
    %212 = vmatpush1.bf16.msra.mxu0 0
    %213 = vmatprep.subr.bf16.mxu0 0
    %214 = vmatpush1.bf16.msra.mxu0 0
    %215 = vmatprep.subr.bf16.mxu0 0
    %216 = vmatpush1.bf16.msra.mxu0 0
    %217 = vmatprep.subr.bf16.mxu0 0
    %218 = vmatpush1.bf16.msra.mxu0 0
    %219 = vmatprep.subr.bf16.mxu0 0
    %220 = vmatpush1.bf16.msra.mxu0 0
    %221 = vmatprep.mubr.bf16.mxu0 0
    %222 = vmatmul.mubr.bf16.gmra.mrb[0].mxu0 %v171
    %v223 = vpop.f32.mrb[0].mxu0
    %v224 = vadd.f32 %v99, %v223
    %v225 = vpop.f32.mrb[0].mxu0
    %v226 = vadd.f32 %v100, %v225
    %v227 = vpop.f32.mrb[0].mxu0
    %v228 = vadd.f32 %v103, %v227
    %v229 = vpop.f32.mrb[0].mxu0
    %v230 = vadd.f32 %v104, %v229
    %231 = vmatprep.mubr.bf16.mxu0 0
    %232 = vmatmul.mubr.bf16.gmra.mrb[0].mxu0 %v174
    %v233 = vpop.f32.mrb[0].mxu0
    %v234 = vadd.f32 %v107, %v233
    %v235 = vpop.f32.mrb[0].mxu0
    %v236 = vadd.f32 %v108, %v235
    %v237 = vpop.f32.mrb[0].mxu0
    %v238 = vpop.f32.mrb[0].mxu0
    %239 = vdwg.mxu0
    %240 = vmatprep.subr.bf16.mxu0 %v152
    %241 = vmatpush1.bf16.msra.mxu0 %v151
    %242 = vmatprep.subr.bf16.mxu0 %v156
    %243 = vmatpush1.bf16.msra.mxu0 %v155
    %244 = vmatprep.subr.bf16.mxu0 %v187
    %245 = vmatpush1.bf16.msra.mxu0 %v184
    %246 = vmatprep.subr.bf16.mxu0 0
    %247 = vmatpush1.bf16.msra.mxu0 0
    %248 = vmatprep.subr.bf16.mxu0 0
    %249 = vmatpush1.bf16.msra.mxu0 0
    %250 = vmatprep.subr.bf16.mxu0 0
    %251 = vmatpush1.bf16.msra.mxu0 0
    %252 = vmatprep.subr.bf16.mxu0 0
    %253 = vmatpush1.bf16.msra.mxu0 0
    %254 = vmatprep.subr.bf16.mxu0 0
    %255 = vmatpush1.bf16.msra.mxu0 0
    %256 = vmatprep.subr.bf16.mxu0 0
    %257 = vmatpush1.bf16.msra.mxu0 0
    %258 = vmatprep.subr.bf16.mxu0 0
    %259 = vmatpush1.bf16.msra.mxu0 0
    %260 = vmatprep.subr.bf16.mxu0 0
    %261 = vmatpush1.bf16.msra.mxu0 0
    %262 = vmatprep.subr.bf16.mxu0 0
    %263 = vmatpush1.bf16.msra.mxu0 0
    %264 = vmatprep.subr.bf16.mxu0 0
    %265 = vmatpush1.bf16.msra.mxu0 0
    %266 = vmatprep.subr.bf16.mxu0 0
    %267 = vmatpush1.bf16.msra.mxu0 0
    %268 = vmatprep.subr.bf16.mxu0 0
    %269 = vmatpush1.bf16.msra.mxu0 0
    %270 = vmatprep.subr.bf16.mxu0 0
    %271 = vmatpush1.bf16.msra.mxu0 0
    %272 = vmatprep.mubr.bf16.mxu0 0
    %273 = vmatmul.mubr.bf16.gmra.mrb[0].mxu0 %v171
    %v274 = vpop.f32.mrb[0].mxu0
    %v275 = vadd.f32 %v101, %v274
    %v276 = vpop.f32.mrb[0].mxu0
    %v277 = vadd.f32 %v102, %v276
    %v278 = vpop.f32.mrb[0].mxu0
    %v279 = vadd.f32 %v105, %v278
    %v280 = vpop.f32.mrb[0].mxu0
    %v281 = vadd.f32 %v106, %v280
    %282 = vmatprep.mubr.bf16.mxu0 0
    %283 = vmatmul.mubr.bf16.gmra.mrb[0].mxu0 %v174
    %v284 = vpop.f32.mrb[0].mxu0
    %v285 = vadd.f32 %v109, %v284
    %v286 = vpop.f32.mrb[0].mxu0
    %v287 = vadd.f32 %v110, %v286
    %v288 = vpop.f32.mrb[0].mxu0
    %v289 = vpop.f32.mrb[0].mxu0
    %290 = vdwg.mxu0
    %291 = vst [vmem:[#allocation11] sm:$0xf] %v224
    %292 = vst [vmem:[#allocation11 + $0x8] sm:$0xf] %v226
    %293 = vst [vmem:[#allocation11 + $0x10] sm:$0xf] %v275
    %294 = vst [vmem:[#allocation11 + $0x18] sm:$0xf] %v277
    %v295 = vld [vmem:[#allocation8] sm:$0xf]
    %v296 = vld [vmem:[#allocation10] sm:$0xf]
    %v301 = vcombine.high %v224, %v226
    %v302 = vcombine.low %v228, %v230
    %v305 = vmul.f32 %v301, 0.5
    %v306 = vmul.f32 %v302, 0.5
    %v309 = vcombine.high %v228, %v230
    %v310 = vcombine.low %v234, %v236
    %v313 = vmul.f32 %v309, 0.5
    %v314 = vmul.f32 %v310, 0.5
    %v315 = vcombine.high %v234, %v236
    %v317 = vunpack.c.l.s4 1983009808
    %v318 = vunpack.c.0.s8 %v317
    %v319 = vlaneseq
    %v320 = vshrl.u32 %v319, 7
    %v321 = vsub.s32 %v318, %v320
    %v322 = vrot.slane %v315, %v321
    %v323 = vcombine.high %v322, %v322
    %v326 = vcombine.high %v305, %v305
    %v327 = vcombine.high %v306, %v306
    %vm330 = vcmask 1043456
    %v331 = vsel %vm330, %v305, -inf
    %v332 = vsel %vm330, %v326, -inf
    %v333 = vmax.f32 %v331, %v332
    %334 = vmax.xlane.f32.xlu0 %v333
    %v335 = vpop.xlane.xlu0 %334
    %v336 = vsel %vm330, %v306, -inf
    %v337 = vsel %vm330, %v327, -inf
    %v338 = vmax.f32 %v336, %v337
    %339 = vmax.xlane.f32.xlu0 %v338
    %v340 = vpop.xlane.xlu0 %339
    %v344 = vunpack.c.l.s4 839922192
    %v345 = vunpack.c.0.s8 %v344
    %v346 = vlaneseq
    %v347 = vshrl.u32 %v346, 7
    %v348 = vsub.s32 %v345, %v347
    %v349 = vrot.slane %v335, %v348
    %v351 = vunpack.c.l.s4 839922192
    %v352 = vunpack.c.0.s8 %v351
    %v353 = vlaneseq
    %v354 = vshrl.u32 %v353, 7
    %v355 = vsub.s32 %v352, %v354
    %v356 = vrot.slane %v340, %v355
    %v359 = vsub.f32 %v305, %v349
    %v360 = vsub.f32 %v306, %v356
    %v361 = vmul.f32 %v359, 1.442695
    %v362 = vpow.pop %v361
    %v363 = vmul.f32 %v360, 1.442695
    %v364 = vpow.pop %v363
    %v367 = vcombine.high %v362, %v362
    %v368 = vcombine.high %v364, %v364
    %v371 = vsel %vm330, %v362, 0.0
    %v372 = vsel %vm330, %v367, 0.0
    %v373 = vadd.f32 %v371, %v372
    %374 = vadd.xlane.f32.xlu0 %v373
    %v375 = vpop.xlane.xlu0 %374
    %v376 = vsel %vm330, %v364, 0.0
    %v377 = vsel %vm330, %v368, 0.0
    %v378 = vadd.f32 %v376, %v377
    %379 = vadd.xlane.f32.xlu0 %v378
    %v380 = vpop.xlane.xlu0 %379
    %v381 = vrcp.pop %v375
    %v382 = vrcp.pop %v380
    %v386 = vunpack.c.l.s4 839922192
    %v387 = vunpack.c.0.s8 %v386
    %v388 = vlaneseq
    %v389 = vshrl.u32 %v388, 7
    %v390 = vsub.s32 %v387, %v389
    %v391 = vrot.slane %v381, %v390
    %v393 = vunpack.c.l.s4 839922192
    %v394 = vunpack.c.0.s8 %v393
    %v395 = vlaneseq
    %v396 = vshrl.u32 %v395, 7
    %v397 = vsub.s32 %v394, %v396
    %v398 = vrot.slane %v382, %v397
    %v401 = vmul.f32 %v362, %v391
    %v402 = vmul.f32 %v364, %v398
    %v405 = vcombine.high %v313, %v313
    %v406 = vcombine.high %v314, %v314
    %v409 = vsel %vm330, %v313, -inf
    %v410 = vrot.slane %v409, 4
    %v411 = vmax.f32 %v409, %v410
    %v412 = vrot.slane %v411, 2
    %v413 = vmax.f32 %v411, %v412
    %v414 = vrot.slane %v413, 1
    %v415 = vmax.f32 %v413, %v414
    %v416 = vsel %vm330, %v405, -inf
    %v417 = vrot.slane %v416, 4
    %v418 = vmax.f32 %v416, %v417
    %v419 = vrot.slane %v418, 2
    %v420 = vmax.f32 %v418, %v419
    %v421 = vrot.slane %v420, 1
    %v422 = vmax.f32 %v420, %v421
    %v423 = vsel %vm330, %v314, -inf
    %v424 = vrot.slane %v423, 4
    %v425 = vmax.f32 %v423, %v424
    %v426 = vrot.slane %v425, 2
    %v427 = vmax.f32 %v425, %v426
    %v428 = vrot.slane %v427, 1
    %v429 = vmax.f32 %v427, %v428
    %v430 = vsel %vm330, %v406, -inf
    %v431 = vrot.slane %v430, 4
    %v432 = vmax.f32 %v430, %v431
    %v433 = vrot.slane %v432, 2
    %v434 = vmax.f32 %v432, %v433
    %v435 = vrot.slane %v434, 1
    %v436 = vmax.f32 %v434, %v435
    %v441 = vcombine.low %v415, %v422
    %v442 = vcombine.low %v429, %v436
    %v445 = vsub.f32 %v313, %v441
    %v446 = vsub.f32 %v314, %v442
    %v447 = vmul.f32 %v445, 1.442695
    %v448 = vpow.pop %v447
    %v449 = vmul.f32 %v446, 1.442695
    %v450 = vpow.pop %v449
    %v453 = vcombine.high %v448, %v448
    %v454 = vcombine.high %v450, %v450
    %v457 = vsel %vm330, %v448, 0.0
    %v458 = vrot.slane %v457, 4
    %v459 = vadd.f32 %v457, %v458
    %v460 = vrot.slane %v459, 2
    %v461 = vadd.f32 %v459, %v460
    %v462 = vrot.slane %v461, 1
    %v463 = vadd.f32 %v461, %v462
    %v464 = vsel %vm330, %v453, 0.0
    %v465 = vrot.slane %v464, 4
    %v466 = vadd.f32 %v464, %v465
    %v467 = vrot.slane %v466, 2
    %v468 = vadd.f32 %v466, %v467
    %v469 = vrot.slane %v468, 1
    %v470 = vadd.f32 %v468, %v469
    %v471 = vsel %vm330, %v450, 0.0
    %v472 = vrot.slane %v471, 4
    %v473 = vadd.f32 %v471, %v472
    %v474 = vrot.slane %v473, 2
    %v475 = vadd.f32 %v473, %v474
    %v476 = vrot.slane %v475, 1
    %v477 = vadd.f32 %v475, %v476
    %v478 = vsel %vm330, %v454, 0.0
    %v479 = vrot.slane %v478, 4
    %v480 = vadd.f32 %v478, %v479
    %v481 = vrot.slane %v480, 2
    %v482 = vadd.f32 %v480, %v481
    %v483 = vrot.slane %v482, 1
    %v484 = vadd.f32 %v482, %v483
    %v485 = vrcp.pop %v463
    %v486 = vrcp.pop %v470
    %v487 = vrcp.pop %v477
    %v488 = vrcp.pop %v484
    %v493 = vcombine.low %v485, %v486
    %v494 = vcombine.low %v487, %v488
    %v497 = vmul.f32 %v448, %v493
    %v498 = vmul.f32 %v450, %v494
    %v500 = vcombine.high %v497, %v497
    %v503 = vunpack.c.l.s4 1983009808
    %v504 = vunpack.c.0.s8 %v503
    %v505 = vlaneseq
    %v506 = vshrl.u32 %v505, 7
    %v507 = vsub.s32 %v504, %v506
    %v508 = vrot.slane %v322, %v507
    %v509 = vcombine.high %v508, %v508
    %512 = vmatprep.subr.mxu0 %v509
    %513 = vmatpush1.xpose.msra.mxu0 %v508
    %514 = vmatprep.subr.mxu0 0.0
    %515 = vmatpush1.xpose.msra.mxu0 0.0
    %516 = vmatprep.subr.mxu0 0.0
    %517 = vmatpush1.xpose.msra.mxu0 0.0
    %518 = vmatprep.subr.mxu0 0.0
    %519 = vmatpush1.xpose.msra.mxu0 0.0
    %520 = vmatprep.subr.mxu0 0.0
    %521 = vmatpush1.xpose.msra.mxu0 0.0
    %522 = vmatprep.subr.mxu0 0.0
    %523 = vmatpush1.xpose.msra.mxu0 0.0
    %524 = vmatprep.subr.mxu0 0.0
    %525 = vmatpush1.xpose.msra.mxu0 0.0
    %526 = vmatprep.subr.mxu0 0.0
    %527 = vmatpush1.xpose.msra.mxu0 0.0
    %528 = vmatprep.subr.mxu0 0.0
    %529 = vmatpush1.xpose.msra.mxu0 0.0
    %530 = vmatprep.subr.mxu0 0.0
    %531 = vmatpush1.xpose.msra.mxu0 0.0
    %532 = vmatprep.subr.mxu0 0.0
    %533 = vmatpush1.xpose.msra.mxu0 0.0
    %534 = vmatprep.subr.mxu0 0.0
    %535 = vmatpush1.xpose.msra.mxu0 0.0
    %536 = vmatprep.subr.mxu0 0.0
    %537 = vmatpush1.xpose.msra.mxu0 0.0
    %538 = vmatprep.subr.mxu0 0.0
    %539 = vmatpush1.xpose.msra.mxu0 0.0
    %540 = vmatprep.subr.mxu0 0.0
    %541 = vmatpush1.xpose.msra.mxu0 0.0
    %542 = vmatprep.subr.mxu0 0.0
    %543 = vmatpush1.xpose.msra.mxu0 0.0
    %544 = vmatprep.subr.mxu0 0.0
    %545 = vmatpush1.xpose.msra.mxu0 0.0
    %546 = vmatprep.subr.mxu0 0.0
    %547 = vmatpush1.xpose.msra.mxu0 0.0
    %548 = vmatprep.subr.mxu0 0.0
    %549 = vmatpush1.xpose.msra.mxu0 0.0
    %550 = vmatprep.subr.mxu0 0.0
    %551 = vmatpush1.xpose.msra.mxu0 0.0
    %552 = vmatprep.subr.mxu0 0.0
    %553 = vmatpush1.xpose.msra.mxu0 0.0
    %554 = vmatprep.subr.mxu0 0.0
    %555 = vmatpush1.xpose.msra.mxu0 0.0
    %556 = vmatprep.subr.mxu0 0.0
    %557 = vmatpush1.xpose.msra.mxu0 0.0
    %558 = vmatprep.subr.mxu0 0.0
    %559 = vmatpush1.xpose.msra.mxu0 0.0
    %560 = vmatprep.subr.mxu0 0.0
    %561 = vmatpush1.xpose.msra.mxu0 0.0
    %562 = vmatprep.subr.mxu0 0.0
    %563 = vmatpush1.xpose.msra.mxu0 0.0
    %564 = vmatprep.subr.mxu0 0.0
    %565 = vmatpush1.xpose.msra.mxu0 0.0
    %566 = vmatprep.subr.mxu0 0.0
    %567 = vmatpush1.xpose.msra.mxu0 0.0
    %568 = vmatprep.subr.mxu0 0.0
    %569 = vmatpush1.xpose.msra.mxu0 0.0
    %570 = vmatprep.subr.mxu0 0.0
    %571 = vmatpush1.xpose.msra.mxu0 0.0
    %572 = vmatprep.subr.mxu0 0.0
    %573 = vmatpush1.xpose.msra.mxu0 0.0
    %574 = vmatprep.subr.mxu0 0.0
    %575 = vmatpush1.xpose.msra.mxu0 0.0
    %576 = vmatprep.mubr.f32.mxu0 %v500
    %577 = vmatmul.mubr.f32.gmra.mrb[0].mxu0 %v497
    %v578 = vpop.f32.mrb[0].mxu0
    %v579 = vadd.f32 0.0, %v578
    %v580 = vpop.f32.mrb[0].mxu0
    %581 = vdwg.mxu0
    %v583 = vcombine.high %v498, %v498
    %v586 = vunpack.c.l.s4 1983009808
    %v587 = vunpack.c.0.s8 %v586
    %v588 = vlaneseq
    %v589 = vshrl.u32 %v588, 7
    %v590 = vsub.s32 %v587, %v589
    %v591 = vrot.slane %v323, %v590
    %v592 = vcombine.high %v591, %v591
    %595 = vmatprep.subr.mxu0 %v592
    %596 = vmatpush1.xpose.msra.mxu0 %v591
    %597 = vmatprep.subr.mxu0 0.0
    %598 = vmatpush1.xpose.msra.mxu0 0.0
    %599 = vmatprep.subr.mxu0 0.0
    %600 = vmatpush1.xpose.msra.mxu0 0.0
    %601 = vmatprep.subr.mxu0 0.0
    %602 = vmatpush1.xpose.msra.mxu0 0.0
    %603 = vmatprep.subr.mxu0 0.0
    %604 = vmatpush1.xpose.msra.mxu0 0.0
    %605 = vmatprep.subr.mxu0 0.0
    %606 = vmatpush1.xpose.msra.mxu0 0.0
    %607 = vmatprep.subr.mxu0 0.0
    %608 = vmatpush1.xpose.msra.mxu0 0.0
    %609 = vmatprep.subr.mxu0 0.0
    %610 = vmatpush1.xpose.msra.mxu0 0.0
    %611 = vmatprep.subr.mxu0 0.0
    %612 = vmatpush1.xpose.msra.mxu0 0.0
    %613 = vmatprep.subr.mxu0 0.0
    %614 = vmatpush1.xpose.msra.mxu0 0.0
    %615 = vmatprep.subr.mxu0 0.0
    %616 = vmatpush1.xpose.msra.mxu0 0.0
    %617 = vmatprep.subr.mxu0 0.0
    %618 = vmatpush1.xpose.msra.mxu0 0.0
    %619 = vmatprep.subr.mxu0 0.0
    %620 = vmatpush1.xpose.msra.mxu0 0.0
    %621 = vmatprep.subr.mxu0 0.0
    %622 = vmatpush1.xpose.msra.mxu0 0.0
    %623 = vmatprep.subr.mxu0 0.0
    %624 = vmatpush1.xpose.msra.mxu0 0.0
    %625 = vmatprep.subr.mxu0 0.0
    %626 = vmatpush1.xpose.msra.mxu0 0.0
    %627 = vmatprep.subr.mxu0 0.0
    %628 = vmatpush1.xpose.msra.mxu0 0.0
    %629 = vmatprep.subr.mxu0 0.0
    %630 = vmatpush1.xpose.msra.mxu0 0.0
    %631 = vmatprep.subr.mxu0 0.0
    %632 = vmatpush1.xpose.msra.mxu0 0.0
    %633 = vmatprep.subr.mxu0 0.0
    %634 = vmatpush1.xpose.msra.mxu0 0.0
    %635 = vmatprep.subr.mxu0 0.0
    %636 = vmatpush1.xpose.msra.mxu0 0.0
    %637 = vmatprep.subr.mxu0 0.0
    %638 = vmatpush1.xpose.msra.mxu0 0.0
    %639 = vmatprep.subr.mxu0 0.0
    %640 = vmatpush1.xpose.msra.mxu0 0.0
    %641 = vmatprep.subr.mxu0 0.0
    %642 = vmatpush1.xpose.msra.mxu0 0.0
    %643 = vmatprep.subr.mxu0 0.0
    %644 = vmatpush1.xpose.msra.mxu0 0.0
    %645 = vmatprep.subr.mxu0 0.0
    %646 = vmatpush1.xpose.msra.mxu0 0.0
    %647 = vmatprep.subr.mxu0 0.0
    %648 = vmatpush1.xpose.msra.mxu0 0.0
    %649 = vmatprep.subr.mxu0 0.0
    %650 = vmatpush1.xpose.msra.mxu0 0.0
    %651 = vmatprep.subr.mxu0 0.0
    %652 = vmatpush1.xpose.msra.mxu0 0.0
    %653 = vmatprep.subr.mxu0 0.0
    %654 = vmatpush1.xpose.msra.mxu0 0.0
    %655 = vmatprep.subr.mxu0 0.0
    %656 = vmatpush1.xpose.msra.mxu0 0.0
    %657 = vmatprep.subr.mxu0 0.0
    %658 = vmatpush1.xpose.msra.mxu0 0.0
    %659 = vmatprep.mubr.f32.mxu0 %v583
    %660 = vmatmul.mubr.f32.gmra.mrb[0].mxu0 %v498
    %v661 = vpop.f32.mrb[0].mxu0
    %v662 = vadd.f32 0.0, %v661
    %v663 = vpop.f32.mrb[0].mxu0
    %664 = vdwg.mxu0
    %665 = vxpose.xlu0.b32.start [1/16] %v579, 128
    %666 = vxpose.xlu0.b32.cont [2/16] 0.0, 128
    %667 = vxpose.xlu0.b32.cont [3/16] 0.0, 128
    %668 = vxpose.xlu0.b32.cont [4/16] 0.0, 128
    %669 = vxpose.xlu0.b32.cont [5/16] 0.0, 128
    %670 = vxpose.xlu0.b32.cont [6/16] 0.0, 128
    %671 = vxpose.xlu0.b32.cont [7/16] 0.0, 128
    %672 = vxpose.xlu0.b32.cont [8/16] 0.0, 128
    %673 = vxpose.xlu0.b32.cont [9/16] 0.0, 128
    %674 = vxpose.xlu0.b32.cont [10/16] 0.0, 128
    %675 = vxpose.xlu0.b32.cont [11/16] 0.0, 128
    %676 = vxpose.xlu0.b32.cont [12/16] 0.0, 128
    %677 = vxpose.xlu0.b32.cont [13/16] 0.0, 128
    %678 = vxpose.xlu0.b32.cont [14/16] 0.0, 128
    %679 = vxpose.xlu0.b32.cont [15/16] 0.0, 128
    %680 = vxpose.xlu0.b32.end [16/16] 0.0, 128
    %v681 = vpop.trf.xlu0
    %v682 = vpop.trf.xlu0
    %v683 = vpop.trf.xlu0
    %v684 = vpop.trf.xlu0
    %v685 = vpop.trf.xlu0
    %v686 = vpop.trf.xlu0
    %v687 = vpop.trf.xlu0
    %v688 = vpop.trf.xlu0
    %v689 = vpop.trf.xlu0
    %v690 = vpop.trf.xlu0
    %v691 = vpop.trf.xlu0
    %v692 = vpop.trf.xlu0
    %v693 = vpop.trf.xlu0
    %v694 = vpop.trf.xlu0
    %v695 = vpop.trf.xlu0
    %v696 = vpop.trf.xlu0
    %v698 = vcombine.high %v401, %v401
    %vm699 = vcmask 31744
    %v701 = vsel %vm699, %v681, 0
    %v703 = vsel %vm330, %v401, 0
    %v705 = vsel %vm330, %v698, 0
    %707 = vmatprep.subr.mxu0 %v705
    %708 = vmatpush1.msra.mxu0 %v703
    %709 = vmatprep.subr.mxu0 0.0
    %710 = vmatpush1.msra.mxu0 0.0
    %711 = vmatprep.subr.mxu0 0.0
    %712 = vmatpush1.msra.mxu0 0.0
    %713 = vmatprep.subr.mxu0 0.0
    %714 = vmatpush1.msra.mxu0 0.0
    %715 = vmatprep.subr.mxu0 0.0
    %716 = vmatpush1.msra.mxu0 0.0
    %717 = vmatprep.subr.mxu0 0.0
    %718 = vmatpush1.msra.mxu0 0.0
    %719 = vmatprep.subr.mxu0 0.0
    %720 = vmatpush1.msra.mxu0 0.0
    %721 = vmatprep.subr.mxu0 0.0
    %722 = vmatpush1.msra.mxu0 0.0
    %723 = vmatprep.subr.mxu0 0.0
    %724 = vmatpush1.msra.mxu0 0.0
    %725 = vmatprep.subr.mxu0 0.0
    %726 = vmatpush1.msra.mxu0 0.0
    %727 = vmatprep.subr.mxu0 0.0
    %728 = vmatpush1.msra.mxu0 0.0
    %729 = vmatprep.subr.mxu0 0.0
    %730 = vmatpush1.msra.mxu0 0.0
    %731 = vmatprep.subr.mxu0 0.0
    %732 = vmatpush1.msra.mxu0 0.0
    %733 = vmatprep.subr.mxu0 0.0
    %734 = vmatpush1.msra.mxu0 0.0
    %735 = vmatprep.subr.mxu0 0.0
    %736 = vmatpush1.msra.mxu0 0.0
    %737 = vmatprep.subr.mxu0 0.0
    %738 = vmatpush1.msra.mxu0 0.0
    %739 = vmatprep.subr.mxu0 0.0
    %740 = vmatpush1.msra.mxu0 0.0
    %741 = vmatprep.subr.mxu0 0.0
    %742 = vmatpush1.msra.mxu0 0.0
    %743 = vmatprep.subr.mxu0 0.0
    %744 = vmatpush1.msra.mxu0 0.0
    %745 = vmatprep.subr.mxu0 0.0
    %746 = vmatpush1.msra.mxu0 0.0
    %747 = vmatprep.subr.mxu0 0.0
    %748 = vmatpush1.msra.mxu0 0.0
    %749 = vmatprep.subr.mxu0 0.0
    %750 = vmatpush1.msra.mxu0 0.0
    %751 = vmatprep.subr.mxu0 0.0
    %752 = vmatpush1.msra.mxu0 0.0
    %753 = vmatprep.subr.mxu0 0.0
    %754 = vmatpush1.msra.mxu0 0.0
    %755 = vmatprep.subr.mxu0 0.0
    %756 = vmatpush1.msra.mxu0 0.0
    %757 = vmatprep.subr.mxu0 0.0
    %758 = vmatpush1.msra.mxu0 0.0
    %759 = vmatprep.subr.mxu0 0.0
    %760 = vmatpush1.msra.mxu0 0.0
    %761 = vmatprep.subr.mxu0 0.0
    %762 = vmatpush1.msra.mxu0 0.0
    %763 = vmatprep.subr.mxu0 0.0
    %764 = vmatpush1.msra.mxu0 0.0
    %765 = vmatprep.subr.mxu0 0.0
    %766 = vmatpush1.msra.mxu0 0.0
    %767 = vmatprep.subr.mxu0 0.0
    %768 = vmatpush1.msra.mxu0 0.0
    %769 = vmatprep.subr.mxu0 0.0
    %770 = vmatpush1.msra.mxu0 0.0
    %771 = vmatprep.mubr.f32.mxu0 0.0
    %772 = vmatmul.mubr.f32.gmra.mrb[0].mxu0 %v701
    %v773 = vpop.f32.mrb[0].mxu0
    %v774 = vadd.f32 0.0, %v773
    %v775 = vpop.f32.mrb[0].mxu0
    %v776 = vadd.f32 0.0, %v775
    %777 = vdwg.mxu0
    %778 = vxpose.xlu0.b32.start [1/16] %v662, 128
    %779 = vxpose.xlu0.b32.cont [2/16] 0.0, 128
    %780 = vxpose.xlu0.b32.cont [3/16] 0.0, 128
    %781 = vxpose.xlu0.b32.cont [4/16] 0.0, 128
    %782 = vxpose.xlu0.b32.cont [5/16] 0.0, 128
    %783 = vxpose.xlu0.b32.cont [6/16] 0.0, 128
    %784 = vxpose.xlu0.b32.cont [7/16] 0.0, 128
    %785 = vxpose.xlu0.b32.cont [8/16] 0.0, 128
    %786 = vxpose.xlu0.b32.cont [9/16] 0.0, 128
    %787 = vxpose.xlu0.b32.cont [10/16] 0.0, 128
    %788 = vxpose.xlu0.b32.cont [11/16] 0.0, 128
    %789 = vxpose.xlu0.b32.cont [12/16] 0.0, 128
    %790 = vxpose.xlu0.b32.cont [13/16] 0.0, 128
    %791 = vxpose.xlu0.b32.cont [14/16] 0.0, 128
    %792 = vxpose.xlu0.b32.cont [15/16] 0.0, 128
    %793 = vxpose.xlu0.b32.end [16/16] 0.0, 128
    %v794 = vpop.trf.xlu0
    %v795 = vpop.trf.xlu0
    %v796 = vpop.trf.xlu0
    %v797 = vpop.trf.xlu0
    %v798 = vpop.trf.xlu0
    %v799 = vpop.trf.xlu0
    %v800 = vpop.trf.xlu0
    %v801 = vpop.trf.xlu0
    %v802 = vpop.trf.xlu0
    %v803 = vpop.trf.xlu0
    %v804 = vpop.trf.xlu0
    %v805 = vpop.trf.xlu0
    %v806 = vpop.trf.xlu0
    %v807 = vpop.trf.xlu0
    %v808 = vpop.trf.xlu0
    %v809 = vpop.trf.xlu0
    %v811 = vcombine.high %v402, %v402
    %v813 = vsel %vm699, %v794, 0
    %v815 = vsel %vm330, %v402, 0
    %v817 = vsel %vm330, %v811, 0
    %819 = vmatprep.subr.mxu0 %v817
    %820 = vmatpush1.msra.mxu0 %v815
    %821 = vmatprep.subr.mxu0 0.0
    %822 = vmatpush1.msra.mxu0 0.0
    %823 = vmatprep.subr.mxu0 0.0
    %824 = vmatpush1.msra.mxu0 0.0
    %825 = vmatprep.subr.mxu0 0.0
    %826 = vmatpush1.msra.mxu0 0.0
    %827 = vmatprep.subr.mxu0 0.0
    %828 = vmatpush1.msra.mxu0 0.0
    %829 = vmatprep.subr.mxu0 0.0
    %830 = vmatpush1.msra.mxu0 0.0
    %831 = vmatprep.subr.mxu0 0.0
    %832 = vmatpush1.msra.mxu0 0.0
    %833 = vmatprep.subr.mxu0 0.0
    %834 = vmatpush1.msra.mxu0 0.0
    %835 = vmatprep.subr.mxu0 0.0
    %836 = vmatpush1.msra.mxu0 0.0
    %837 = vmatprep.subr.mxu0 0.0
    %838 = vmatpush1.msra.mxu0 0.0
    %839 = vmatprep.subr.mxu0 0.0
    %840 = vmatpush1.msra.mxu0 0.0
    %841 = vmatprep.subr.mxu0 0.0
    %842 = vmatpush1.msra.mxu0 0.0
    %843 = vmatprep.subr.mxu0 0.0
    %844 = vmatpush1.msra.mxu0 0.0
    %845 = vmatprep.subr.mxu0 0.0
    %846 = vmatpush1.msra.mxu0 0.0
    %847 = vmatprep.subr.mxu0 0.0
    %848 = vmatpush1.msra.mxu0 0.0
    %849 = vmatprep.subr.mxu0 0.0
    %850 = vmatpush1.msra.mxu0 0.0
    %851 = vmatprep.subr.mxu0 0.0
    %852 = vmatpush1.msra.mxu0 0.0
    %853 = vmatprep.subr.mxu0 0.0
    %854 = vmatpush1.msra.mxu0 0.0
    %855 = vmatprep.subr.mxu0 0.0
    %856 = vmatpush1.msra.mxu0 0.0
    %857 = vmatprep.subr.mxu0 0.0
    %858 = vmatpush1.msra.mxu0 0.0
    %859 = vmatprep.subr.mxu0 0.0
    %860 = vmatpush1.msra.mxu0 0.0
    %861 = vmatprep.subr.mxu0 0.0
    %862 = vmatpush1.msra.mxu0 0.0
    %863 = vmatprep.subr.mxu0 0.0
    %864 = vmatpush1.msra.mxu0 0.0
    %865 = vmatprep.subr.mxu0 0.0
    %866 = vmatpush1.msra.mxu0 0.0
    %867 = vmatprep.subr.mxu0 0.0
    %868 = vmatpush1.msra.mxu0 0.0
    %869 = vmatprep.subr.mxu0 0.0
    %870 = vmatpush1.msra.mxu0 0.0
    %871 = vmatprep.subr.mxu0 0.0
    %872 = vmatpush1.msra.mxu0 0.0
    %873 = vmatprep.subr.mxu0 0.0
    %874 = vmatpush1.msra.mxu0 0.0
    %875 = vmatprep.subr.mxu0 0.0
    %876 = vmatpush1.msra.mxu0 0.0
    %877 = vmatprep.subr.mxu0 0.0
    %878 = vmatpush1.msra.mxu0 0.0
    %879 = vmatprep.subr.mxu0 0.0
    %880 = vmatpush1.msra.mxu0 0.0
    %881 = vmatprep.subr.mxu0 0.0
    %882 = vmatpush1.msra.mxu0 0.0
    %883 = vmatprep.mubr.f32.mxu0 0.0
    %884 = vmatmul.mubr.f32.gmra.mrb[0].mxu0 %v813
    %v885 = vpop.f32.mrb[0].mxu0
    %v886 = vadd.f32 0.0, %v885
    %v887 = vpop.f32.mrb[0].mxu0
    %v888 = vadd.f32 0.0, %v887
    %889 = vdwg.mxu0
    %v894 = vcombine.low %v774, %v776
    %v896 = vunpack.c.l.s4 1983009808
    %v897 = vunpack.c.0.s8 %v896
    %v898 = vlaneseq
    %v899 = vshrl.u32 %v898, 7
    %v900 = vsub.s32 %v897, %v899
    %v901 = vrot.slane %v894, %v900
    %v902 = vcombine.low %v886, %v888
    %v904 = vunpack.c.l.s4 1983009808
    %v905 = vunpack.c.0.s8 %v904
    %v906 = vlaneseq
    %v907 = vshrl.u32 %v906, 7
    %v908 = vsub.s32 %v905, %v907
    %v909 = vrot.slane %v902, %v908
    %911 = vset.pattern.permute.xlu0 0
    %912 = vperm.xlu0 %911, %v296
    %v913 = vpop.permute.xlu0 %912
    %v915 = vcombine.low %v901, %v909
    %v917 = vunpack.c.l.s4 1983009808
    %v918 = vunpack.c.0.s8 %v917
    %v919 = vlaneseq
    %v920 = vshrl.u32 %v919, 7
    %v921 = vsub.s32 %v918, %v920
    %v922 = vrot.slane %v915, %v921
    %v923 = vcombine.high %v922, %v922
    %v925 = vsel %vm699, %v295, 0
    %v927 = vsel %vm330, %v922, 0
    %v929 = vsel %vm330, %v923, 0
    %931 = vmatprep.subr.mxu0 %v929
    %932 = vmatpush1.msra.mxu0 %v927
    %933 = vmatprep.subr.mxu0 0.0
    %934 = vmatpush1.msra.mxu0 0.0
    %935 = vmatprep.subr.mxu0 0.0
    %936 = vmatpush1.msra.mxu0 0.0
    %937 = vmatprep.subr.mxu0 0.0
    %938 = vmatpush1.msra.mxu0 0.0
    %939 = vmatprep.subr.mxu0 0.0
    %940 = vmatpush1.msra.mxu0 0.0
    %941 = vmatprep.subr.mxu0 0.0
    %942 = vmatpush1.msra.mxu0 0.0
    %943 = vmatprep.subr.mxu0 0.0
    %944 = vmatpush1.msra.mxu0 0.0
    %945 = vmatprep.subr.mxu0 0.0
    %946 = vmatpush1.msra.mxu0 0.0
    %947 = vmatprep.subr.mxu0 0.0
    %948 = vmatpush1.msra.mxu0 0.0
    %949 = vmatprep.subr.mxu0 0.0
    %950 = vmatpush1.msra.mxu0 0.0
    %951 = vmatprep.subr.mxu0 0.0
    %952 = vmatpush1.msra.mxu0 0.0
    %953 = vmatprep.subr.mxu0 0.0
    %954 = vmatpush1.msra.mxu0 0.0
    %955 = vmatprep.subr.mxu0 0.0
    %956 = vmatpush1.msra.mxu0 0.0
    %957 = vmatprep.subr.mxu0 0.0
    %958 = vmatpush1.msra.mxu0 0.0
    %959 = vmatprep.subr.mxu0 0.0
    %960 = vmatpush1.msra.mxu0 0.0
    %961 = vmatprep.subr.mxu0 0.0
    %962 = vmatpush1.msra.mxu0 0.0
    %963 = vmatprep.subr.mxu0 0.0
    %964 = vmatpush1.msra.mxu0 0.0
    %965 = vmatprep.subr.mxu0 0.0
    %966 = vmatpush1.msra.mxu0 0.0
    %967 = vmatprep.subr.mxu0 0.0
    %968 = vmatpush1.msra.mxu0 0.0
    %969 = vmatprep.subr.mxu0 0.0
    %970 = vmatpush1.msra.mxu0 0.0
    %971 = vmatprep.subr.mxu0 0.0
    %972 = vmatpush1.msra.mxu0 0.0
    %973 = vmatprep.subr.mxu0 0.0
    %974 = vmatpush1.msra.mxu0 0.0
    %975 = vmatprep.subr.mxu0 0.0
    %976 = vmatpush1.msra.mxu0 0.0
    %977 = vmatprep.subr.mxu0 0.0
    %978 = vmatpush1.msra.mxu0 0.0
    %979 = vmatprep.subr.mxu0 0.0
    %980 = vmatpush1.msra.mxu0 0.0
    %981 = vmatprep.subr.mxu0 0.0
    %982 = vmatpush1.msra.mxu0 0.0
    %983 = vmatprep.subr.mxu0 0.0
    %984 = vmatpush1.msra.mxu0 0.0
    %985 = vmatprep.subr.mxu0 0.0
    %986 = vmatpush1.msra.mxu0 0.0
    %987 = vmatprep.subr.mxu0 0.0
    %988 = vmatpush1.msra.mxu0 0.0
    %989 = vmatprep.subr.mxu0 0.0
    %990 = vmatpush1.msra.mxu0 0.0
    %991 = vmatprep.subr.mxu0 0.0
    %992 = vmatpush1.msra.mxu0 0.0
    %993 = vmatprep.subr.mxu0 0.0
    %994 = vmatpush1.msra.mxu0 0.0
    %995 = vmatprep.mubr.f32.mxu0 0.0
    %996 = vmatmul.mubr.f32.gmra.mrb[0].mxu0 %v925
    %v997 = vpop.f32.mrb[0].mxu0
    %v998 = vadd.f32 %v913, %v997
    %v999 = vpop.f32.mrb[0].mxu0
    %v1000 = vadd.f32 %v913, %v999
    %1001 = vdwg.mxu0
    %v1004 = vrot.slane %v998, 4
    %v1005 = vrot.slane %v1000, 4
    %1008 = vst [vmem:[#allocation11] sm:$0xf0] %v1004
    %1009 = vst [vmem:[#allocation11 + $0x8] sm:$0xf0] %v1005
    %v1014 = vcombine.high %v275, %v277
    %v1015 = vcombine.low %v279, %v281
    %v1018 = vmul.f32 %v1014, 0.5
    %v1019 = vmul.f32 %v1015, 0.5
    %v1022 = vcombine.high %v279, %v281
    %v1023 = vcombine.low %v285, %v287
    %v1026 = vmul.f32 %v1022, 0.5
    %v1027 = vmul.f32 %v1023, 0.5
    %v1028 = vcombine.high %v285, %v287
    %v1030 = vunpack.c.l.s4 1983009808
    %v1031 = vunpack.c.0.s8 %v1030
    %v1032 = vlaneseq
    %v1033 = vshrl.u32 %v1032, 7
    %v1034 = vsub.s32 %v1031, %v1033
    %v1035 = vrot.slane %v1028, %v1034
    %v1036 = vcombine.high %v1035, %v1035
    %v1039 = vcombine.high %v1018, %v1018
    %v1040 = vcombine.high %v1019, %v1019
    %v1043 = vsel %vm330, %v1018, -inf
    %v1044 = vsel %vm330, %v1039, -inf
    %v1045 = vmax.f32 %v1043, %v1044
    %1046 = vmax.xlane.f32.xlu0 %v1045
    %v1047 = vpop.xlane.xlu0 %1046
    %v1048 = vsel %vm330, %v1019, -inf
    %v1049 = vsel %vm330, %v1040, -inf
    %v1050 = vmax.f32 %v1048, %v1049
    %1051 = vmax.xlane.f32.xlu0 %v1050
    %v1052 = vpop.xlane.xlu0 %1051
    %v1056 = vunpack.c.l.s4 839922192
    %v1057 = vunpack.c.0.s8 %v1056
    %v1058 = vlaneseq
    %v1059 = vshrl.u32 %v1058, 7
    %v1060 = vsub.s32 %v1057, %v1059
    %v1061 = vrot.slane %v1047, %v1060
    %v1063 = vunpack.c.l.s4 839922192
    %v1064 = vunpack.c.0.s8 %v1063
    %v1065 = vlaneseq
    %v1066 = vshrl.u32 %v1065, 7
    %v1067 = vsub.s32 %v1064, %v1066
    %v1068 = vrot.slane %v1052, %v1067
    %v1071 = vsub.f32 %v1018, %v1061
    %v1072 = vsub.f32 %v1019, %v1068
    %v1073 = vmul.f32 %v1071, 1.442695
    %v1074 = vpow.pop %v1073
    %v1075 = vmul.f32 %v1072, 1.442695
    %v1076 = vpow.pop %v1075
    %v1079 = vcombine.high %v1074, %v1074
    %v1080 = vcombine.high %v1076, %v1076
    %v1083 = vsel %vm330, %v1074, 0.0
    %v1084 = vsel %vm330, %v1079, 0.0
    %v1085 = vadd.f32 %v1083, %v1084
    %1086 = vadd.xlane.f32.xlu0 %v1085
    %v1087 = vpop.xlane.xlu0 %1086
    %v1088 = vsel %vm330, %v1076, 0.0
    %v1089 = vsel %vm330, %v1080, 0.0
    %v1090 = vadd.f32 %v1088, %v1089
    %1091 = vadd.xlane.f32.xlu0 %v1090
    %v1092 = vpop.xlane.xlu0 %1091
    %v1093 = vrcp.pop %v1087
    %v1094 = vrcp.pop %v1092
    %v1098 = vunpack.c.l.s4 839922192
    %v1099 = vunpack.c.0.s8 %v1098
    %v1100 = vlaneseq
    %v1101 = vshrl.u32 %v1100, 7
    %v1102 = vsub.s32 %v1099, %v1101
    %v1103 = vrot.slane %v1093, %v1102
    %v1105 = vunpack.c.l.s4 839922192
    %v1106 = vunpack.c.0.s8 %v1105
    %v1107 = vlaneseq
    %v1108 = vshrl.u32 %v1107, 7
    %v1109 = vsub.s32 %v1106, %v1108
    %v1110 = vrot.slane %v1094, %v1109
    %v1113 = vmul.f32 %v1074, %v1103
    %v1114 = vmul.f32 %v1076, %v1110
    %v1117 = vcombine.high %v1026, %v1026
    %v1118 = vcombine.high %v1027, %v1027
    %v1121 = vsel %vm330, %v1026, -inf
    %v1122 = vrot.slane %v1121, 4
    %v1123 = vmax.f32 %v1121, %v1122
    %v1124 = vrot.slane %v1123, 2
    %v1125 = vmax.f32 %v1123, %v1124
    %v1126 = vrot.slane %v1125, 1
    %v1127 = vmax.f32 %v1125, %v1126
    %v1128 = vsel %vm330, %v1117, -inf
    %v1129 = vrot.slane %v1128, 4
    %v1130 = vmax.f32 %v1128, %v1129
    %v1131 = vrot.slane %v1130, 2
    %v1132 = vmax.f32 %v1130, %v1131
    %v1133 = vrot.slane %v1132, 1
    %v1134 = vmax.f32 %v1132, %v1133
    %v1135 = vsel %vm330, %v1027, -inf
    %v1136 = vrot.slane %v1135, 4
    %v1137 = vmax.f32 %v1135, %v1136
    %v1138 = vrot.slane %v1137, 2
    %v1139 = vmax.f32 %v1137, %v1138
    %v1140 = vrot.slane %v1139, 1
    %v1141 = vmax.f32 %v1139, %v1140
    %v1142 = vsel %vm330, %v1118, -inf
    %v1143 = vrot.slane %v1142, 4
    %v1144 = vmax.f32 %v1142, %v1143
    %v1145 = vrot.slane %v1144, 2
    %v1146 = vmax.f32 %v1144, %v1145
    %v1147 = vrot.slane %v1146, 1
    %v1148 = vmax.f32 %v1146, %v1147
    %v1153 = vcombine.low %v1127, %v1134
    %v1154 = vcombine.low %v1141, %v1148
    %v1157 = vsub.f32 %v1026, %v1153
    %v1158 = vsub.f32 %v1027, %v1154
    %v1159 = vmul.f32 %v1157, 1.442695
    %v1160 = vpow.pop %v1159
    %v1161 = vmul.f32 %v1158, 1.442695
    %v1162 = vpow.pop %v1161
    %v1165 = vcombine.high %v1160, %v1160
    %v1166 = vcombine.high %v1162, %v1162
    %v1169 = vsel %vm330, %v1160, 0.0
    %v1170 = vrot.slane %v1169, 4
    %v1171 = vadd.f32 %v1169, %v1170
    %v1172 = vrot.slane %v1171, 2
    %v1173 = vadd.f32 %v1171, %v1172
    %v1174 = vrot.slane %v1173, 1
    %v1175 = vadd.f32 %v1173, %v1174
    %v1176 = vsel %vm330, %v1165, 0.0
    %v1177 = vrot.slane %v1176, 4
    %v1178 = vadd.f32 %v1176, %v1177
    %v1179 = vrot.slane %v1178, 2
    %v1180 = vadd.f32 %v1178, %v1179
    %v1181 = vrot.slane %v1180, 1
    %v1182 = vadd.f32 %v1180, %v1181
    %v1183 = vsel %vm330, %v1162, 0.0
    %v1184 = vrot.slane %v1183, 4
    %v1185 = vadd.f32 %v1183, %v1184
    %v1186 = vrot.slane %v1185, 2
    %v1187 = vadd.f32 %v1185, %v1186
    %v1188 = vrot.slane %v1187, 1
    %v1189 = vadd.f32 %v1187, %v1188
    %v1190 = vsel %vm330, %v1166, 0.0
    %v1191 = vrot.slane %v1190, 4
    %v1192 = vadd.f32 %v1190, %v1191
    %v1193 = vrot.slane %v1192, 2
    %v1194 = vadd.f32 %v1192, %v1193
    %v1195 = vrot.slane %v1194, 1
    %v1196 = vadd.f32 %v1194, %v1195
    %v1197 = vrcp.pop %v1175
    %v1198 = vrcp.pop %v1182
    %v1199 = vrcp.pop %v1189
    %v1200 = vrcp.pop %v1196
    %v1205 = vcombine.low %v1197, %v1198
    %v1206 = vcombine.low %v1199, %v1200
    %v1209 = vmul.f32 %v1160, %v1205
    %v1210 = vmul.f32 %v1162, %v1206
    %v1212 = vcombine.high %v1209, %v1209
    %v1215 = vunpack.c.l.s4 1983009808
    %v1216 = vunpack.c.0.s8 %v1215
    %v1217 = vlaneseq
    %v1218 = vshrl.u32 %v1217, 7
    %v1219 = vsub.s32 %v1216, %v1218
    %v1220 = vrot.slane %v1035, %v1219
    %v1221 = vcombine.high %v1220, %v1220
    %1224 = vmatprep.subr.mxu0 %v1221
    %1225 = vmatpush1.xpose.msra.mxu0 %v1220
    %1226 = vmatprep.subr.mxu0 0.0
    %1227 = vmatpush1.xpose.msra.mxu0 0.0
    %1228 = vmatprep.subr.mxu0 0.0
    %1229 = vmatpush1.xpose.msra.mxu0 0.0
    %1230 = vmatprep.subr.mxu0 0.0
    %1231 = vmatpush1.xpose.msra.mxu0 0.0
    %1232 = vmatprep.subr.mxu0 0.0
    %1233 = vmatpush1.xpose.msra.mxu0 0.0
    %1234 = vmatprep.subr.mxu0 0.0
    %1235 = vmatpush1.xpose.msra.mxu0 0.0
    %1236 = vmatprep.subr.mxu0 0.0
    %1237 = vmatpush1.xpose.msra.mxu0 0.0
    %1238 = vmatprep.subr.mxu0 0.0
    %1239 = vmatpush1.xpose.msra.mxu0 0.0
    %1240 = vmatprep.subr.mxu0 0.0
    %1241 = vmatpush1.xpose.msra.mxu0 0.0
    %1242 = vmatprep.subr.mxu0 0.0
    %1243 = vmatpush1.xpose.msra.mxu0 0.0
    %1244 = vmatprep.subr.mxu0 0.0
    %1245 = vmatpush1.xpose.msra.mxu0 0.0
    %1246 = vmatprep.subr.mxu0 0.0
    %1247 = vmatpush1.xpose.msra.mxu0 0.0
    %1248 = vmatprep.subr.mxu0 0.0
    %1249 = vmatpush1.xpose.msra.mxu0 0.0
    %1250 = vmatprep.subr.mxu0 0.0
    %1251 = vmatpush1.xpose.msra.mxu0 0.0
    %1252 = vmatprep.subr.mxu0 0.0
    %1253 = vmatpush1.xpose.msra.mxu0 0.0
    %1254 = vmatprep.subr.mxu0 0.0
    %1255 = vmatpush1.xpose.msra.mxu0 0.0
    %1256 = vmatprep.subr.mxu0 0.0
    %1257 = vmatpush1.xpose.msra.mxu0 0.0
    %1258 = vmatprep.subr.mxu0 0.0
    %1259 = vmatpush1.xpose.msra.mxu0 0.0
    %1260 = vmatprep.subr.mxu0 0.0
    %1261 = vmatpush1.xpose.msra.mxu0 0.0
    %1262 = vmatprep.subr.mxu0 0.0
    %1263 = vmatpush1.xpose.msra.mxu0 0.0
    %1264 = vmatprep.subr.mxu0 0.0
    %1265 = vmatpush1.xpose.msra.mxu0 0.0
    %1266 = vmatprep.subr.mxu0 0.0
    %1267 = vmatpush1.xpose.msra.mxu0 0.0
    %1268 = vmatprep.subr.mxu0 0.0
    %1269 = vmatpush1.xpose.msra.mxu0 0.0
    %1270 = vmatprep.subr.mxu0 0.0
    %1271 = vmatpush1.xpose.msra.mxu0 0.0
    %1272 = vmatprep.subr.mxu0 0.0
    %1273 = vmatpush1.xpose.msra.mxu0 0.0
    %1274 = vmatprep.subr.mxu0 0.0
    %1275 = vmatpush1.xpose.msra.mxu0 0.0
    %1276 = vmatprep.subr.mxu0 0.0
    %1277 = vmatpush1.xpose.msra.mxu0 0.0
    %1278 = vmatprep.subr.mxu0 0.0
    %1279 = vmatpush1.xpose.msra.mxu0 0.0
    %1280 = vmatprep.subr.mxu0 0.0
    %1281 = vmatpush1.xpose.msra.mxu0 0.0
    %1282 = vmatprep.subr.mxu0 0.0
    %1283 = vmatpush1.xpose.msra.mxu0 0.0
    %1284 = vmatprep.subr.mxu0 0.0
    %1285 = vmatpush1.xpose.msra.mxu0 0.0
    %1286 = vmatprep.subr.mxu0 0.0
    %1287 = vmatpush1.xpose.msra.mxu0 0.0
    %1288 = vmatprep.mubr.f32.mxu0 %v1212
    %1289 = vmatmul.mubr.f32.gmra.mrb[0].mxu0 %v1209
    %v1290 = vpop.f32.mrb[0].mxu0
    %v1291 = vadd.f32 0.0, %v1290
    %v1292 = vpop.f32.mrb[0].mxu0
    %1293 = vdwg.mxu0
    %v1295 = vcombine.high %v1210, %v1210
    %v1298 = vunpack.c.l.s4 1983009808
    %v1299 = vunpack.c.0.s8 %v1298
    %v1300 = vlaneseq
    %v1301 = vshrl.u32 %v1300, 7
    %v1302 = vsub.s32 %v1299, %v1301
    %v1303 = vrot.slane %v1036, %v1302
    %v1304 = vcombine.high %v1303, %v1303
    %1307 = vmatprep.subr.mxu0 %v1304
    %1308 = vmatpush1.xpose.msra.mxu0 %v1303
    %1309 = vmatprep.subr.mxu0 0.0
    %1310 = vmatpush1.xpose.msra.mxu0 0.0
    %1311 = vmatprep.subr.mxu0 0.0
    %1312 = vmatpush1.xpose.msra.mxu0 0.0
    %1313 = vmatprep.subr.mxu0 0.0
    %1314 = vmatpush1.xpose.msra.mxu0 0.0
    %1315 = vmatprep.subr.mxu0 0.0
    %1316 = vmatpush1.xpose.msra.mxu0 0.0
    %1317 = vmatprep.subr.mxu0 0.0
    %1318 = vmatpush1.xpose.msra.mxu0 0.0
    %1319 = vmatprep.subr.mxu0 0.0
    %1320 = vmatpush1.xpose.msra.mxu0 0.0
    %1321 = vmatprep.subr.mxu0 0.0
    %1322 = vmatpush1.xpose.msra.mxu0 0.0
    %1323 = vmatprep.subr.mxu0 0.0
    %1324 = vmatpush1.xpose.msra.mxu0 0.0
    %1325 = vmatprep.subr.mxu0 0.0
    %1326 = vmatpush1.xpose.msra.mxu0 0.0
    %1327 = vmatprep.subr.mxu0 0.0
    %1328 = vmatpush1.xpose.msra.mxu0 0.0
    %1329 = vmatprep.subr.mxu0 0.0
    %1330 = vmatpush1.xpose.msra.mxu0 0.0
    %1331 = vmatprep.subr.mxu0 0.0
    %1332 = vmatpush1.xpose.msra.mxu0 0.0
    %1333 = vmatprep.subr.mxu0 0.0
    %1334 = vmatpush1.xpose.msra.mxu0 0.0
    %1335 = vmatprep.subr.mxu0 0.0
    %1336 = vmatpush1.xpose.msra.mxu0 0.0
    %1337 = vmatprep.subr.mxu0 0.0
    %1338 = vmatpush1.xpose.msra.mxu0 0.0
    %1339 = vmatprep.subr.mxu0 0.0
    %1340 = vmatpush1.xpose.msra.mxu0 0.0
    %1341 = vmatprep.subr.mxu0 0.0
    %1342 = vmatpush1.xpose.msra.mxu0 0.0
    %1343 = vmatprep.subr.mxu0 0.0
    %1344 = vmatpush1.xpose.msra.mxu0 0.0
    %1345 = vmatprep.subr.mxu0 0.0
    %1346 = vmatpush1.xpose.msra.mxu0 0.0
    %1347 = vmatprep.subr.mxu0 0.0
    %1348 = vmatpush1.xpose.msra.mxu0 0.0
    %1349 = vmatprep.subr.mxu0 0.0
    %1350 = vmatpush1.xpose.msra.mxu0 0.0
    %1351 = vmatprep.subr.mxu0 0.0
    %1352 = vmatpush1.xpose.msra.mxu0 0.0
    %1353 = vmatprep.subr.mxu0 0.0
    %1354 = vmatpush1.xpose.msra.mxu0 0.0
    %1355 = vmatprep.subr.mxu0 0.0
    %1356 = vmatpush1.xpose.msra.mxu0 0.0
    %1357 = vmatprep.subr.mxu0 0.0
    %1358 = vmatpush1.xpose.msra.mxu0 0.0
    %1359 = vmatprep.subr.mxu0 0.0
    %1360 = vmatpush1.xpose.msra.mxu0 0.0
    %1361 = vmatprep.subr.mxu0 0.0
    %1362 = vmatpush1.xpose.msra.mxu0 0.0
    %1363 = vmatprep.subr.mxu0 0.0
    %1364 = vmatpush1.xpose.msra.mxu0 0.0
    %1365 = vmatprep.subr.mxu0 0.0
    %1366 = vmatpush1.xpose.msra.mxu0 0.0
    %1367 = vmatprep.subr.mxu0 0.0
    %1368 = vmatpush1.xpose.msra.mxu0 0.0
    %1369 = vmatprep.subr.mxu0 0.0
    %1370 = vmatpush1.xpose.msra.mxu0 0.0
    %1371 = vmatprep.mubr.f32.mxu0 %v1295
    %1372 = vmatmul.mubr.f32.gmra.mrb[0].mxu0 %v1210
    %v1373 = vpop.f32.mrb[0].mxu0
    %v1374 = vadd.f32 0.0, %v1373
    %v1375 = vpop.f32.mrb[0].mxu0
    %1376 = vdwg.mxu0
    %1377 = vxpose.xlu0.b32.start [1/16] %v1291, 128
    %1378 = vxpose.xlu0.b32.cont [2/16] 0.0, 128
    %1379 = vxpose.xlu0.b32.cont [3/16] 0.0, 128
    %1380 = vxpose.xlu0.b32.cont [4/16] 0.0, 128
    %1381 = vxpose.xlu0.b32.cont [5/16] 0.0, 128
    %1382 = vxpose.xlu0.b32.cont [6/16] 0.0, 128
    %1383 = vxpose.xlu0.b32.cont [7/16] 0.0, 128
    %1384 = vxpose.xlu0.b32.cont [8/16] 0.0, 128
    %1385 = vxpose.xlu0.b32.cont [9/16] 0.0, 128
    %1386 = vxpose.xlu0.b32.cont [10/16] 0.0, 128
    %1387 = vxpose.xlu0.b32.cont [11/16] 0.0, 128
    %1388 = vxpose.xlu0.b32.cont [12/16] 0.0, 128
    %1389 = vxpose.xlu0.b32.cont [13/16] 0.0, 128
    %1390 = vxpose.xlu0.b32.cont [14/16] 0.0, 128
    %1391 = vxpose.xlu0.b32.cont [15/16] 0.0, 128
    %1392 = vxpose.xlu0.b32.end [16/16] 0.0, 128
    %v1393 = vpop.trf.xlu0
    %v1394 = vpop.trf.xlu0
    %v1395 = vpop.trf.xlu0
    %v1396 = vpop.trf.xlu0
    %v1397 = vpop.trf.xlu0
    %v1398 = vpop.trf.xlu0
    %v1399 = vpop.trf.xlu0
    %v1400 = vpop.trf.xlu0
    %v1401 = vpop.trf.xlu0
    %v1402 = vpop.trf.xlu0
    %v1403 = vpop.trf.xlu0
    %v1404 = vpop.trf.xlu0
    %v1405 = vpop.trf.xlu0
    %v1406 = vpop.trf.xlu0
    %v1407 = vpop.trf.xlu0
    %v1408 = vpop.trf.xlu0
    %v1410 = vcombine.high %v1113, %v1113
    %v1412 = vsel %vm699, %v1393, 0
    %v1414 = vsel %vm330, %v1113, 0
    %v1416 = vsel %vm330, %v1410, 0
    %1418 = vmatprep.subr.mxu0 %v1416
    %1419 = vmatpush1.msra.mxu0 %v1414
    %1420 = vmatprep.subr.mxu0 0.0
    %1421 = vmatpush1.msra.mxu0 0.0
    %1422 = vmatprep.subr.mxu0 0.0
    %1423 = vmatpush1.msra.mxu0 0.0
    %1424 = vmatprep.subr.mxu0 0.0
    %1425 = vmatpush1.msra.mxu0 0.0
    %1426 = vmatprep.subr.mxu0 0.0
    %1427 = vmatpush1.msra.mxu0 0.0
    %1428 = vmatprep.subr.mxu0 0.0
    %1429 = vmatpush1.msra.mxu0 0.0
    %1430 = vmatprep.subr.mxu0 0.0
    %1431 = vmatpush1.msra.mxu0 0.0
    %1432 = vmatprep.subr.mxu0 0.0
    %1433 = vmatpush1.msra.mxu0 0.0
    %1434 = vmatprep.subr.mxu0 0.0
    %1435 = vmatpush1.msra.mxu0 0.0
    %1436 = vmatprep.subr.mxu0 0.0
    %1437 = vmatpush1.msra.mxu0 0.0
    %1438 = vmatprep.subr.mxu0 0.0
    %1439 = vmatpush1.msra.mxu0 0.0
    %1440 = vmatprep.subr.mxu0 0.0
    %1441 = vmatpush1.msra.mxu0 0.0
    %1442 = vmatprep.subr.mxu0 0.0
    %1443 = vmatpush1.msra.mxu0 0.0
    %1444 = vmatprep.subr.mxu0 0.0
    %1445 = vmatpush1.msra.mxu0 0.0
    %1446 = vmatprep.subr.mxu0 0.0
    %1447 = vmatpush1.msra.mxu0 0.0
    %1448 = vmatprep.subr.mxu0 0.0
    %1449 = vmatpush1.msra.mxu0 0.0
    %1450 = vmatprep.subr.mxu0 0.0
    %1451 = vmatpush1.msra.mxu0 0.0
    %1452 = vmatprep.subr.mxu0 0.0
    %1453 = vmatpush1.msra.mxu0 0.0
    %1454 = vmatprep.subr.mxu0 0.0
    %1455 = vmatpush1.msra.mxu0 0.0
    %1456 = vmatprep.subr.mxu0 0.0
    %1457 = vmatpush1.msra.mxu0 0.0
    %1458 = vmatprep.subr.mxu0 0.0
    %1459 = vmatpush1.msra.mxu0 0.0
    %1460 = vmatprep.subr.mxu0 0.0
    %1461 = vmatpush1.msra.mxu0 0.0
    %1462 = vmatprep.subr.mxu0 0.0
    %1463 = vmatpush1.msra.mxu0 0.0
    %1464 = vmatprep.subr.mxu0 0.0
    %1465 = vmatpush1.msra.mxu0 0.0
    %1466 = vmatprep.subr.mxu0 0.0
    %1467 = vmatpush1.msra.mxu0 0.0
    %1468 = vmatprep.subr.mxu0 0.0
    %1469 = vmatpush1.msra.mxu0 0.0
    %1470 = vmatprep.subr.mxu0 0.0
    %1471 = vmatpush1.msra.mxu0 0.0
    %1472 = vmatprep.subr.mxu0 0.0
    %1473 = vmatpush1.msra.mxu0 0.0
    %1474 = vmatprep.subr.mxu0 0.0
    %1475 = vmatpush1.msra.mxu0 0.0
    %1476 = vmatprep.subr.mxu0 0.0
    %1477 = vmatpush1.msra.mxu0 0.0
    %1478 = vmatprep.subr.mxu0 0.0
    %1479 = vmatpush1.msra.mxu0 0.0
    %1480 = vmatprep.subr.mxu0 0.0
    %1481 = vmatpush1.msra.mxu0 0.0
    %1482 = vmatprep.mubr.f32.mxu0 0.0
    %1483 = vmatmul.mubr.f32.gmra.mrb[0].mxu0 %v1412
    %v1484 = vpop.f32.mrb[0].mxu0
    %v1485 = vadd.f32 0.0, %v1484
    %v1486 = vpop.f32.mrb[0].mxu0
    %v1487 = vadd.f32 0.0, %v1486
    %1488 = vdwg.mxu0
    %1489 = vxpose.xlu0.b32.start [1/16] %v1374, 128
    %1490 = vxpose.xlu0.b32.cont [2/16] 0.0, 128
    %1491 = vxpose.xlu0.b32.cont [3/16] 0.0, 128
    %1492 = vxpose.xlu0.b32.cont [4/16] 0.0, 128
    %1493 = vxpose.xlu0.b32.cont [5/16] 0.0, 128
    %1494 = vxpose.xlu0.b32.cont [6/16] 0.0, 128
    %1495 = vxpose.xlu0.b32.cont [7/16] 0.0, 128
    %1496 = vxpose.xlu0.b32.cont [8/16] 0.0, 128
    %1497 = vxpose.xlu0.b32.cont [9/16] 0.0, 128
    %1498 = vxpose.xlu0.b32.cont [10/16] 0.0, 128
    %1499 = vxpose.xlu0.b32.cont [11/16] 0.0, 128
    %1500 = vxpose.xlu0.b32.cont [12/16] 0.0, 128
    %1501 = vxpose.xlu0.b32.cont [13/16] 0.0, 128
    %1502 = vxpose.xlu0.b32.cont [14/16] 0.0, 128
    %1503 = vxpose.xlu0.b32.cont [15/16] 0.0, 128
    %1504 = vxpose.xlu0.b32.end [16/16] 0.0, 128
    %v1505 = vpop.trf.xlu0
    %v1506 = vpop.trf.xlu0
    %v1507 = vpop.trf.xlu0
    %v1508 = vpop.trf.xlu0
    %v1509 = vpop.trf.xlu0
    %v1510 = vpop.trf.xlu0
    %v1511 = vpop.trf.xlu0
    %v1512 = vpop.trf.xlu0
    %v1513 = vpop.trf.xlu0
    %v1514 = vpop.trf.xlu0
    %v1515 = vpop.trf.xlu0
    %v1516 = vpop.trf.xlu0
    %v1517 = vpop.trf.xlu0
    %v1518 = vpop.trf.xlu0
    %v1519 = vpop.trf.xlu0
    %v1520 = vpop.trf.xlu0
    %v1522 = vcombine.high %v1114, %v1114
    %v1524 = vsel %vm699, %v1505, 0
    %v1526 = vsel %vm330, %v1114, 0
    %v1528 = vsel %vm330, %v1522, 0
    %1530 = vmatprep.subr.mxu0 %v1528
    %1531 = vmatpush1.msra.mxu0 %v1526
    %1532 = vmatprep.subr.mxu0 0.0
    %1533 = vmatpush1.msra.mxu0 0.0
    %1534 = vmatprep.subr.mxu0 0.0
    %1535 = vmatpush1.msra.mxu0 0.0
    %1536 = vmatprep.subr.mxu0 0.0
    %1537 = vmatpush1.msra.mxu0 0.0
    %1538 = vmatprep.subr.mxu0 0.0
    %1539 = vmatpush1.msra.mxu0 0.0
    %1540 = vmatprep.subr.mxu0 0.0
    %1541 = vmatpush1.msra.mxu0 0.0
    %1542 = vmatprep.subr.mxu0 0.0
    %1543 = vmatpush1.msra.mxu0 0.0
    %1544 = vmatprep.subr.mxu0 0.0
    %1545 = vmatpush1.msra.mxu0 0.0
    %1546 = vmatprep.subr.mxu0 0.0
    %1547 = vmatpush1.msra.mxu0 0.0
    %1548 = vmatprep.subr.mxu0 0.0
    %1549 = vmatpush1.msra.mxu0 0.0
    %1550 = vmatprep.subr.mxu0 0.0
    %1551 = vmatpush1.msra.mxu0 0.0
    %1552 = vmatprep.subr.mxu0 0.0
    %1553 = vmatpush1.msra.mxu0 0.0
    %1554 = vmatprep.subr.mxu0 0.0
    %1555 = vmatpush1.msra.mxu0 0.0
    %1556 = vmatprep.subr.mxu0 0.0
    %1557 = vmatpush1.msra.mxu0 0.0
    %1558 = vmatprep.subr.mxu0 0.0
    %1559 = vmatpush1.msra.mxu0 0.0
    %1560 = vmatprep.subr.mxu0 0.0
    %1561 = vmatpush1.msra.mxu0 0.0
    %1562 = vmatprep.subr.mxu0 0.0
    %1563 = vmatpush1.msra.mxu0 0.0
    %1564 = vmatprep.subr.mxu0 0.0
    %1565 = vmatpush1.msra.mxu0 0.0
    %1566 = vmatprep.subr.mxu0 0.0
    %1567 = vmatpush1.msra.mxu0 0.0
    %1568 = vmatprep.subr.mxu0 0.0
    %1569 = vmatpush1.msra.mxu0 0.0
    %1570 = vmatprep.subr.mxu0 0.0
    %1571 = vmatpush1.msra.mxu0 0.0
    %1572 = vmatprep.subr.mxu0 0.0
    %1573 = vmatpush1.msra.mxu0 0.0
    %1574 = vmatprep.subr.mxu0 0.0
    %1575 = vmatpush1.msra.mxu0 0.0
    %1576 = vmatprep.subr.mxu0 0.0
    %1577 = vmatpush1.msra.mxu0 0.0
    %1578 = vmatprep.subr.mxu0 0.0
    %1579 = vmatpush1.msra.mxu0 0.0
    %1580 = vmatprep.subr.mxu0 0.0
    %1581 = vmatpush1.msra.mxu0 0.0
    %1582 = vmatprep.subr.mxu0 0.0
    %1583 = vmatpush1.msra.mxu0 0.0
    %1584 = vmatprep.subr.mxu0 0.0
    %1585 = vmatpush1.msra.mxu0 0.0
    %1586 = vmatprep.subr.mxu0 0.0
    %1587 = vmatpush1.msra.mxu0 0.0
    %1588 = vmatprep.subr.mxu0 0.0
    %1589 = vmatpush1.msra.mxu0 0.0
    %1590 = vmatprep.subr.mxu0 0.0
    %1591 = vmatpush1.msra.mxu0 0.0
    %1592 = vmatprep.subr.mxu0 0.0
    %1593 = vmatpush1.msra.mxu0 0.0
    %1594 = vmatprep.mubr.f32.mxu0 0.0
    %1595 = vmatmul.mubr.f32.gmra.mrb[0].mxu0 %v1524
    %v1596 = vpop.f32.mrb[0].mxu0
    %v1597 = vadd.f32 0.0, %v1596
    %v1598 = vpop.f32.mrb[0].mxu0
    %v1599 = vadd.f32 0.0, %v1598
    %1600 = vdwg.mxu0
    %v1605 = vcombine.low %v1485, %v1487
    %v1607 = vunpack.c.l.s4 1983009808
    %v1608 = vunpack.c.0.s8 %v1607
    %v1609 = vlaneseq
    %v1610 = vshrl.u32 %v1609, 7
    %v1611 = vsub.s32 %v1608, %v1610
    %v1612 = vrot.slane %v1605, %v1611
    %v1613 = vcombine.low %v1597, %v1599
    %v1615 = vunpack.c.l.s4 1983009808
    %v1616 = vunpack.c.0.s8 %v1615
    %v1617 = vlaneseq
    %v1618 = vshrl.u32 %v1617, 7
    %v1619 = vsub.s32 %v1616, %v1618
    %v1620 = vrot.slane %v1613, %v1619
    %v1621 = vcombine.low %v1612, %v1620
    %v1623 = vunpack.c.l.s4 1983009808
    %v1624 = vunpack.c.0.s8 %v1623
    %v1625 = vlaneseq
    %v1626 = vshrl.u32 %v1625, 7
    %v1627 = vsub.s32 %v1624, %v1626
    %v1628 = vrot.slane %v1621, %v1627
    %v1629 = vcombine.high %v1628, %v1628
    %v1630 = vsel %vm330, %v1628, 0
    %v1632 = vsel %vm330, %v1629, 0
    %1634 = vmatprep.subr.mxu0 %v1632
    %1635 = vmatpush1.msra.mxu0 %v1630
    %1636 = vmatprep.subr.mxu0 0.0
    %1637 = vmatpush1.msra.mxu0 0.0
    %1638 = vmatprep.subr.mxu0 0.0
    %1639 = vmatpush1.msra.mxu0 0.0
    %1640 = vmatprep.subr.mxu0 0.0
    %1641 = vmatpush1.msra.mxu0 0.0
    %1642 = vmatprep.subr.mxu0 0.0
    %1643 = vmatpush1.msra.mxu0 0.0
    %1644 = vmatprep.subr.mxu0 0.0
    %1645 = vmatpush1.msra.mxu0 0.0
    %1646 = vmatprep.subr.mxu0 0.0
    %1647 = vmatpush1.msra.mxu0 0.0
    %1648 = vmatprep.subr.mxu0 0.0
    %1649 = vmatpush1.msra.mxu0 0.0
    %1650 = vmatprep.subr.mxu0 0.0
    %1651 = vmatpush1.msra.mxu0 0.0
    %1652 = vmatprep.subr.mxu0 0.0
    %1653 = vmatpush1.msra.mxu0 0.0
    %1654 = vmatprep.subr.mxu0 0.0
    %1655 = vmatpush1.msra.mxu0 0.0
    %1656 = vmatprep.subr.mxu0 0.0
    %1657 = vmatpush1.msra.mxu0 0.0
    %1658 = vmatprep.subr.mxu0 0.0
    %1659 = vmatpush1.msra.mxu0 0.0
    %1660 = vmatprep.subr.mxu0 0.0
    %1661 = vmatpush1.msra.mxu0 0.0
    %1662 = vmatprep.subr.mxu0 0.0
    %1663 = vmatpush1.msra.mxu0 0.0
    %1664 = vmatprep.subr.mxu0 0.0
    %1665 = vmatpush1.msra.mxu0 0.0
    %1666 = vmatprep.subr.mxu0 0.0
    %1667 = vmatpush1.msra.mxu0 0.0
    %1668 = vmatprep.subr.mxu0 0.0
    %1669 = vmatpush1.msra.mxu0 0.0
    %1670 = vmatprep.subr.mxu0 0.0
    %1671 = vmatpush1.msra.mxu0 0.0
    %1672 = vmatprep.subr.mxu0 0.0
    %1673 = vmatpush1.msra.mxu0 0.0
    %1674 = vmatprep.subr.mxu0 0.0
    %1675 = vmatpush1.msra.mxu0 0.0
    %1676 = vmatprep.subr.mxu0 0.0
    %1677 = vmatpush1.msra.mxu0 0.0
    %1678 = vmatprep.subr.mxu0 0.0
    %1679 = vmatpush1.msra.mxu0 0.0
    %1680 = vmatprep.subr.mxu0 0.0
    %1681 = vmatpush1.msra.mxu0 0.0
    %1682 = vmatprep.subr.mxu0 0.0
    %1683 = vmatpush1.msra.mxu0 0.0
    %1684 = vmatprep.subr.mxu0 0.0
    %1685 = vmatpush1.msra.mxu0 0.0
    %1686 = vmatprep.subr.mxu0 0.0
    %1687 = vmatpush1.msra.mxu0 0.0
    %1688 = vmatprep.subr.mxu0 0.0
    %1689 = vmatpush1.msra.mxu0 0.0
    %1690 = vmatprep.subr.mxu0 0.0
    %1691 = vmatpush1.msra.mxu0 0.0
    %1692 = vmatprep.subr.mxu0 0.0
    %1693 = vmatpush1.msra.mxu0 0.0
    %1694 = vmatprep.subr.mxu0 0.0
    %1695 = vmatpush1.msra.mxu0 0.0
    %1696 = vmatprep.subr.mxu0 0.0
    %1697 = vmatpush1.msra.mxu0 0.0
    %1698 = vmatprep.mubr.f32.mxu0 0.0
    %1699 = vmatmul.mubr.f32.gmra.mrb[0].mxu0 %v925
    %v1700 = vpop.f32.mrb[0].mxu0
    %v1701 = vadd.f32 %v913, %v1700
    %v1702 = vpop.f32.mrb[0].mxu0
    %v1703 = vadd.f32 %v913, %v1702
    %1704 = vdwg.mxu0
    %v1707 = vrot.slane %v1701, 4
    %v1708 = vrot.slane %v1703, 4
    %1711 = vst [vmem:[#allocation11 + $0x10] sm:$0xf0] %v1707
    %1712 = vst [vmem:[#allocation11 + $0x18] sm:$0xf0] %v1708
    // Predicated region
    $region42: #{tpu_custom_call.1} parent=1 // pred_check
      _
    $region43: #{tpu_custom_call.1} parent=1 // pred_check_branch
      %1714 = sbr.rel (0) target = $region45
    $region44: #{tpu_custom_call.1} parent=1 // pred_region
      %s1716 = ssub.s32 512, 512
      %1717 = vsyncadd [#allocation4], %s1716
      %s1719 = sshll.u32 [#allocation11], 4
      %s1720 = int_to_ptr.vmem [resolvable:$true] %s1719
      %1722 = dma.vmem_to_hbm [thread:$0]  %s1720, 512, %s5, [#allocation4]
    $region45: #{tpu_custom_call.1} parent=1 // pred_fallthru
      _
    // Predicated region
    $region46: #{tpu_custom_call.1} parent=1 // pred_check
      _
    $region47: #{tpu_custom_call.1} parent=1 // pred_check_branch
      %1724 = sbr.rel (0) target = $region49
    $region48: #{tpu_custom_call.1} parent=1 // pred_region
      %1725 = dma.done [#allocation4], 512
    $region49: #{tpu_custom_call.1} parent=1 // pred_fallthru
      _
    %1726 = vsyncpa [#allocation3], 1
    %1727 = vsyncpa [#allocation6], 1
    %1728 = vsyncpa [#allocation9], 1
    %1729 = vsyncpa [#allocation4], 1

</llo_original>
